<compile_context>
chip_gen: v7x
topology: tpu7x:2x2x1
jax: 0.10.0
libtpu: 0.0.40
codegen_flags: <defaults>
</compile_context>

<pallas_src>
import functools

import jax
import jax.numpy as jnp
from jax import lax
from jax.experimental import pallas as pl
from jax.experimental.pallas import tpu as pltpu


# ----------------------------- config / budgets ---------------------------- #
_VMEM_LIMIT = 48 * 1024 * 1024       # fits v7x's 64 MiB; v5e/v6e could go higher
_RESIDENT_B_BYTES = 8 * 1024 * 1024  # keep (N, D) operand fully VMEM-resident below this
_SMALL_PATH_BYTES = 8 * 1024 * 1024  # single fused kernel when adjacency fits below this


def _round_up(x, m):
    return ((x + m - 1) // m) * m


def _choose_tiling(n):
    """Pick padded size + tile (tm == tk) preferring 512-wide tiles."""
    if n >= 4096:
        tile = 512
        np_ = _round_up(n, tile)
    else:
        np_ = _round_up(n, 128)
        tile = max(t for t in (512, 256, 128) if np_ % t == 0)
    return np_, tile


def _pad2(x, rows, cols):
    pr, pc = rows - x.shape[0], cols - x.shape[1]
    if pr or pc:
        x = jnp.pad(x, ((0, pr), (0, pc)))
    return x


# --------------------- tiled adjacency matmul kernels ---------------------- #
def _accumulate(a_ref, b_ref, acc_ref, *, tk, resident_b):
    k = pl.program_id(1)

    @pl.when(k == 0)
    def _():
        acc_ref[...] = jnp.zeros_like(acc_ref)

    a = a_ref[...]
    if resident_b:
        off = pl.multiple_of(k * tk, tk)
        b = b_ref[pl.ds(off, tk), :]
    else:
        b = b_ref[...]
    acc_ref[...] += jnp.dot(a, b, preferred_element_type=jnp.float32)


def _matmul_kernel(a_ref, b_ref, o_ref, acc_ref, *, tk, resident_b):
    _accumulate(a_ref, b_ref, acc_ref, tk=tk, resident_b=resident_b)

    @pl.when(pl.program_id(1) == pl.num_programs(1) - 1)
    def _():
        o_ref[...] = acc_ref[...].astype(o_ref.dtype)


def _matmul_ln_res_kernel(a_ref, b_ref, res_ref, gamma_ref, beta_ref, o_ref,
                          acc_ref, *, tk, resident_b, eps):
    _accumulate(a_ref, b_ref, acc_ref, tk=tk, resident_b=resident_b)

    @pl.when(pl.program_id(1) == pl.num_programs(1) - 1)
    def _():
        acc = acc_ref[...]
        mean = jnp.mean(acc, axis=-1, keepdims=True)
        cent = acc - mean
        var = jnp.mean(cent * cent, axis=-1, keepdims=True)   # biased, like torch LN
        y = cent * lax.rsqrt(var + eps) * gamma_ref[...] + beta_ref[...]
        o_ref[...] = (y + res_ref[...].astype(jnp.float32)).astype(o_ref.dtype)


def _adj_matmul(adj, x, *, ln_params=None, out_dtype, tm, tk):
    """out = adj @ x, optionally fusing LayerNorm(out)*g+b + res in the epilogue."""
    np_, k_ = adj.shape
    kb, d = x.shape
    assert k_ == kb and np_ % tm == 0 and k_ % tk == 0 and d % 128 == 0

    resident_b = k_ * d * jnp.dtype(x.dtype).itemsize <= _RESIDENT_B_BYTES
    a_spec = pl.BlockSpec((tm, tk), lambda i, k: (i, k))
    if resident_b:
        b_spec = pl.BlockSpec((k_, d), lambda i, k: (0, 0))   # fetched once, stays resident
    else:
        b_spec = pl.BlockSpec((tk, d), lambda i, k: (k, 0))
    out_spec = pl.BlockSpec((tm, d), lambda i, k: (i, 0))

    if ln_params is None:
        kernel = functools.partial(_matmul_kernel, tk=tk, resident_b=resident_b)
        in_specs = [a_spec, b_spec]
        args = (adj, x)
    else:
        res, gamma2, beta2, eps = ln_params
        kernel = functools.partial(_matmul_ln_res_kernel, tk=tk,
                                   resident_b=resident_b, eps=eps)
        in_specs = [a_spec, b_spec,
                    pl.BlockSpec((tm, d), lambda i, k: (i, 0)),
                    pl.BlockSpec((1, d), lambda i, k: (0, 0)),
                    pl.BlockSpec((1, d), lambda i, k: (0, 0))]
        args = (adj, x, res, gamma2, beta2)

    return pl.pallas_call(
        kernel,
        out_shape=jax.ShapeDtypeStruct((np_, d), out_dtype),
        grid_spec=pltpu.PrefetchScalarGridSpec(
            num_scalar_prefetch=0,
            grid=(np_ // tm, k_ // tk),
            in_specs=in_specs,
            out_specs=out_spec,
            scratch_shapes=[pltpu.VMEM((tm, d), jnp.float32)]),
        compiler_params=pltpu.CompilerParams(
            dimension_semantics=("parallel", "arbitrary"),
            vmem_limit_bytes=_VMEM_LIMIT),
    )(*args)


# ----------------- small-N fully fused (single kernel) path ---------------- #
def _small_fused_kernel(a_ref, e_ref, res_ref, gamma_ref, beta_ref, o_ref, *, eps):
    a = a_ref[...]
    t1 = jnp.dot(a, e_ref[...], preferred_element_type=jnp.float32)
    t2 = jnp.dot(a, t1.astype(a.dtype), preferred_element_type=jnp.float32)
    mean = jnp.mean(t2, axis=-1, keepdims=True)
    cent = t2 - mean
    var = jnp.mean(cent * cent, axis=-1, keepdims=True)
    y = cent * lax.rsqrt(var + eps) * gamma_ref[...] + beta_ref[...]
    o_ref[...] = (y + res_ref[...]).astype(o_ref.dtype)


def _fused_small_call(adj, e, res, gamma2, beta2, *, eps):
    np_, _ = adj.shape
    d = e.shape[1]
    return pl.pallas_call(
        functools.partial(_small_fused_kernel, eps=eps),
        out_shape=jax.ShapeDtypeStruct((np_, d), jnp.float32),
        grid_spec=pltpu.PrefetchScalarGridSpec(
            num_scalar_prefetch=0,
            grid=(1,),
            in_specs=[pl.BlockSpec((np_, np_), lambda i: (0, 0)),
                      pl.BlockSpec((np_, d), lambda i: (0, 0)),
                      pl.BlockSpec((np_, d), lambda i: (0, 0)),
                      pl.BlockSpec((1, d), lambda i: (0, 0)),
                      pl.BlockSpec((1, d), lambda i: (0, 0))],
            out_specs=pl.BlockSpec((np_, d), lambda i: (0, 0))),
        compiler_params=pltpu.CompilerParams(
            dimension_semantics=("arbitrary",),
            vmem_limit_bytes=_VMEM_LIMIT),
    )(adj, e, res, gamma2, beta2)


# ------------------------------ module forward ----------------------------- #
def local_aware_encoder_forward(ego_embeddings, norm_adj, ln_gamma, ln_beta,
                                n_users, n_layers=1, *, eps=1e-5,
                                use_bf16=True, symmetric_adj=True,
                                force_tiled=False):
    """Mirrors LocalAwareEncoder.forward (only the returned last-layer output)."""
    n, d = ego_embeddings.shape
    assert norm_adj.shape == (n, n)
    assert d % 128 == 0, "hyper_size must be a multiple of 128 (TPU lane width)"

    compute_dtype = jnp.bfloat16 if use_bf16 else jnp.float32
    np_, tile = _choose_tiling(n)

    # Quantize once + zero-pad to tile multiples (padded rows are harmless:
    # zero adjacency rows give LN(0)=beta which is sliced off before return).
    adj = _pad2(norm_adj.astype(compute_dtype), np_, np_)
    if symmetric_adj:
        # D^-1/2 A D^-1/2 is symmetric => A.T @ E == A @ E (no transpose needed).
        adj_t = adj
    else:
        adj_t = _pad2(norm_adj.T.astype(compute_dtype), np_, np_)

    res = _pad2(ego_embeddings.astype(jnp.float32), np_, d)
    ego_q = res.astype(compute_dtype)
    gamma2 = ln_gamma.reshape(1, d).astype(jnp.float32)
    beta2 = ln_beta.reshape(1, d).astype(jnp.float32)

    adj_bytes = np_ * np_ * jnp.dtype(compute_dtype).itemsize
    use_small = symmetric_adj and (not force_tiled) and adj_bytes <= _SMALL_PATH_BYTES

    ego = ego_q
    all_embeddings = []
    for k_layer in range(n_layers):
        if k_layer != n_layers - 1:
            # TODO(synk): EquivSetGNN ("edhnn") layer source not provided.
            raise NotImplementedError("edhnn layers not available; use n_layers=1")
        if use_small:
            out = _fused_small_call(adj, ego, res, gamma2, beta2, eps=eps)
        else:
            # t1 = A.T @ E   (== A @ E for the symmetric normalized adjacency)
            t1 = _adj_matmul(adj_t, ego, out_dtype=compute_dtype, tm=tile, tk=tile)
            # out = LayerNorm(A @ t1) * gamma + beta + res   (fused epilogue)
            out = _adj_matmul(adj, t1, ln_params=(res, gamma2, beta2, eps),
                              out_dtype=jnp.float32, tm=tile, tk=tile)
        all_embeddings.append(out)
        ego = out.astype(compute_dtype)

    final = all_embeddings[-1][:n]
    return final[:n_users], final[n_users:]


# ----------------------------------- main ----------------------------------- #
if __name__ == "__main__":
    key = jax.random.PRNGKey(0)
    n_users, n_items, hyper_size = 130, 190, 128     # N = 320 (exercises padding)
    N = n_users + n_items
    eps = 1e-5

    k1, k2, k3, k4 = jax.random.split(key, 4)

    # Synthetic bipartite interactions -> symmetric D^-1/2 A D^-1/2 adjacency
    R = (jax.random.uniform(k1, (n_users, n_items)) < 0.05).astype(jnp.float32)
    A = jnp.zeros((N, N), jnp.float32)
    A = A.at[:n_users, n_users:].set(R)
    A = A.at[n_users:, :n_users].set(R.T)
    deg = jnp.maximum(A.sum(axis=1), 1.0)
    dinv = 1.0 / jnp.sqrt(deg)
    norm_adj = dinv[:, None] * A * dinv[None, :]

    ego = 0.1 * jax.random.normal(k2, (N, hyper_size), jnp.float32)
    ln_gamma = 1.0 + 0.02 * jax.random.normal(k3, (hyper_size,), jnp.float32)
    ln_beta = 0.02 * jax.random.normal(k4, (hyper_size,), jnp.float32)

    # Matched-precision pure-JAX reference (same bf16-input / f32-accumulate
    # path as the kernels; LayerNorm + residual in f32).
    adj_q = norm_adj.astype(jnp.bfloat16)
    e_q = ego.astype(jnp.bfloat16)
    t1_ref = jnp.dot(adj_q, e_q, preferred_element_type=jnp.float32).astype(jnp.bfloat16)
    t2_ref = jnp.dot(adj_q, t1_ref, preferred_element_type=jnp.float32)
    mean = t2_ref.mean(-1, keepdims=True)
    cent = t2_ref - mean
    var = (cent * cent).mean(-1, keepdims=True)
    ref = cent * lax.rsqrt(var + eps) * ln_gamma + ln_beta + ego

    # 1) default: single fused VMEM-resident kernel (small-N fast path)
    u1, i1 = local_aware_encoder_forward(ego, norm_adj, ln_gamma, ln_beta,
                                         n_users, n_layers=1, eps=eps)
    # 2) general tiled path: tiled matmul + matmul with fused LN/residual epilogue
    u2, i2 = local_aware_encoder_forward(ego, norm_adj, ln_gamma, ln_beta,
                                         n_users, n_layers=1, eps=eps,
                                         force_tiled=True)
    jax.block_until_ready((u1, i1, u2, i2))

    assert u1.shape == (n_users, hyper_size) and i1.shape == (n_items, hyper_size)
    assert u2.shape == (n_users, hyper_size) and i2.shape == (n_items, hyper_size)
    for u_emb, it_emb in ((u1, i1), (u2, i2)):
        assert jnp.allclose(u_emb, ref[:n_users], rtol=1e-2, atol=1e-2)
        assert jnp.allclose(it_emb, ref[n_users:], rtol=1e-2, atol=1e-2)

    print("KERNEL_OK")
</pallas_src>

<mosaic_0001>
module attributes {stable_mosaic.version = 11 : i64} {
  func.func @_small_fused_kernel(%arg0: i32, %arg1: memref<384x384xbf16, #tpu.memory_space<vmem>>, %arg2: memref<384x128xbf16, #tpu.memory_space<vmem>>, %arg3: memref<384x128xf32, #tpu.memory_space<vmem>>, %arg4: memref<1x128xf32, #tpu.memory_space<vmem>>, %arg5: memref<1x128xf32, #tpu.memory_space<vmem>>, %arg6: memref<384x128xf32, #tpu.memory_space<vmem>>) attributes {dimension_semantics = [#tpu.dimension_semantics<arbitrary>], iteration_bounds = array<i64: 1>, scalar_prefetch = 0 : i64, scratch_operands = 0 : i64, tpu.core_type = #tpu.core_type<tc>, window_params = [{pipeline_mode = #tpu.pipeline_mode<synchronous>, transform_indices = @transform_0, window_bounds = array<i64: 384, 384>}, {pipeline_mode = #tpu.pipeline_mode<synchronous>, transform_indices = @transform_1, window_bounds = array<i64: 384, 128>}, {pipeline_mode = #tpu.pipeline_mode<synchronous>, transform_indices = @transform_2, window_bounds = array<i64: 384, 128>}, {pipeline_mode = #tpu.pipeline_mode<synchronous>, transform_indices = @transform_3, window_bounds = array<i64: 1, 128>}, {pipeline_mode = #tpu.pipeline_mode<synchronous>, transform_indices = @transform_4, window_bounds = array<i64: 1, 128>}, {pipeline_mode = #tpu.pipeline_mode<synchronous>, transform_indices = @transform_5, window_bounds = array<i64: 384, 128>}]} {
    %c0 = arith.constant 0 : index
    %c0_0 = arith.constant 0 : index
    %0 = vector.load %arg1[%c0, %c0_0] : memref<384x384xbf16, #tpu.memory_space<vmem>>, vector<384x384xbf16>
    %c0_1 = arith.constant 0 : index
    %c0_2 = arith.constant 0 : index
    %1 = vector.load %arg2[%c0_1, %c0_2] : memref<384x128xbf16, #tpu.memory_space<vmem>>, vector<384x128xbf16>
    %cst = arith.constant dense<0.000000e+00> : vector<384x128xf32>
    %2 = tpu.matmul %0, %1, %cst {dimension_numbers = #tpu.dot_dimension_numbers<[1], [0], [0], [1], [0, 0, 1, 1], [], []>} : vector<384x384xbf16>, vector<384x128xbf16>, vector<384x128xf32> -> vector<384x128xf32>
    %3 = arith.truncf %2 : vector<384x128xf32> to vector<384x128xbf16>
    %cst_3 = arith.constant dense<0.000000e+00> : vector<384x128xf32>
    %4 = tpu.matmul %0, %3, %cst_3 {dimension_numbers = #tpu.dot_dimension_numbers<[1], [0], [0], [1], [0, 0, 1, 1], [], []>} : vector<384x384xbf16>, vector<384x128xbf16>, vector<384x128xf32> -> vector<384x128xf32>
    %cst_4 = arith.constant dense<0.000000e+00> : vector<384xf32>
    %5 = vector.multi_reduction <add>, %4, %cst_4 [1] : vector<384x128xf32> to vector<384xf32>
    %6 = vector.shape_cast %5 : vector<384xf32> to vector<384x1xf32>
    %cst_5 = arith.constant 1.280000e+02 : f32
    %7 = vector.broadcast %cst_5 : f32 to vector<384x1xf32>
    %8 = arith.divf %6, %7 : vector<384x1xf32>
    %9 = vector.broadcast %8 : vector<384x1xf32> to vector<384x128xf32>
    %10 = arith.subf %4, %9 : vector<384x128xf32>
    %11 = arith.mulf %10, %10 : vector<384x128xf32>
    %cst_6 = arith.constant dense<0.000000e+00> : vector<384xf32>
    %12 = vector.multi_reduction <add>, %11, %cst_6 [1] : vector<384x128xf32> to vector<384xf32>
    %13 = vector.shape_cast %12 : vector<384xf32> to vector<384x1xf32>
    %cst_7 = arith.constant 1.280000e+02 : f32
    %14 = vector.broadcast %cst_7 : f32 to vector<384x1xf32>
    %15 = arith.divf %13, %14 : vector<384x1xf32>
    %cst_8 = arith.constant 9.99999974E-6 : f32
    %16 = vector.broadcast %cst_8 : f32 to vector<384x1xf32>
    %17 = arith.addf %15, %16 : vector<384x1xf32>
    %18 = math.rsqrt %17 : vector<384x1xf32>
    %19 = vector.broadcast %18 : vector<384x1xf32> to vector<384x128xf32>
    %20 = arith.mulf %10, %19 : vector<384x128xf32>
    %c0_9 = arith.constant 0 : index
    %c0_10 = arith.constant 0 : index
    %21 = vector.load %arg4[%c0_9, %c0_10] : memref<1x128xf32, #tpu.memory_space<vmem>>, vector<1x128xf32>
    %22 = vector.broadcast %21 : vector<1x128xf32> to vector<384x128xf32>
    %23 = arith.mulf %20, %22 : vector<384x128xf32>
    %c0_11 = arith.constant 0 : index
    %c0_12 = arith.constant 0 : index
    %24 = vector.load %arg5[%c0_11, %c0_12] : memref<1x128xf32, #tpu.memory_space<vmem>>, vector<1x128xf32>
    %25 = vector.broadcast %24 : vector<1x128xf32> to vector<384x128xf32>
    %26 = arith.addf %23, %25 : vector<384x128xf32>
    %c0_13 = arith.constant 0 : index
    %c0_14 = arith.constant 0 : index
    %27 = vector.load %arg3[%c0_13, %c0_14] : memref<384x128xf32, #tpu.memory_space<vmem>>, vector<384x128xf32>
    %28 = arith.addf %26, %27 : vector<384x128xf32>
    %c0_15 = arith.constant 0 : index
    %c0_16 = arith.constant 0 : index
    %29 = vector.load %arg6[%c0_15, %c0_16] : memref<384x128xf32, #tpu.memory_space<vmem>>, vector<384x128xf32>
    tpu.vector_store %arg6[%c0_15, %c0_16], %28 {strides = array<i32>} : memref<384x128xf32, #tpu.memory_space<vmem>>, vector<384x128xf32>,
    return
  }
  func.func @transform_0(%arg0: i32) -> (i32, i32) {
    %c0_i32 = arith.constant 0 : i32
    %c0_i32_0 = arith.constant 0 : i32
    %c0_i32_1 = arith.constant 0 : i32
    return %c0_i32, %c0_i32_0 : i32, i32
  }
  func.func @transform_1(%arg0: i32) -> (i32, i32) {
    %c0_i32 = arith.constant 0 : i32
    %c0_i32_0 = arith.constant 0 : i32
    %c0_i32_1 = arith.constant 0 : i32
    return %c0_i32, %c0_i32_0 : i32, i32
  }
  func.func @transform_2(%arg0: i32) -> (i32, i32) {
    %c0_i32 = arith.constant 0 : i32
    %c0_i32_0 = arith.constant 0 : i32
    %c0_i32_1 = arith.constant 0 : i32
    return %c0_i32, %c0_i32_0 : i32, i32
  }
  func.func @transform_3(%arg0: i32) -> (i32, i32) {
    %c0_i32 = arith.constant 0 : i32
    %c0_i32_0 = arith.constant 0 : i32
    %c0_i32_1 = arith.constant 0 : i32
    return %c0_i32, %c0_i32_0 : i32, i32
  }
  func.func @transform_4(%arg0: i32) -> (i32, i32) {
    %c0_i32 = arith.constant 0 : i32
    %c0_i32_0 = arith.constant 0 : i32
    %c0_i32_1 = arith.constant 0 : i32
    return %c0_i32, %c0_i32_0 : i32, i32
  }
  func.func @transform_5(%arg0: i32) -> (i32, i32) {
    %c0_i32 = arith.constant 0 : i32
    %c0_i32_0 = arith.constant 0 : i32
    %c0_i32_1 = arith.constant 0 : i32
    return %c0_i32, %c0_i32_0 : i32, i32
  }
}

</mosaic_0001>

<llo_original>
// kernel: tpu_custom_call.1
$region0: #{tpu_custom_call.1}
  #allocation0 [shape = 'u32[]', space=smem, size = 0x4, offset = 0x4, fixed_abs, tag = 'smem constant byte address 0x4 - core index']
  #allocation1 [shape = 'u32[144,128]{1,0:T(1,128)}', space=vmem, size = 0x12000, scoped, tag = 'internal scratch']
  %s0 = inlined_call_operand.hbm [shape: bf16[384,384], index: 0, kind: input, shape index: {}]
  %s1 = inlined_call_operand.hbm [shape: bf16[384,128], index: 1, kind: input, shape index: {}]
  %s2 = inlined_call_operand.hbm [shape: f32[384,128], index: 2, kind: input, shape index: {}]
  %s3 = inlined_call_operand.vmem [shape: f32[1,128], index: 3, kind: input, shape index: {}]
  %s4 = inlined_call_operand.vmem [shape: f32[1,128], index: 4, kind: input, shape index: {}]
  %s5 = inlined_call_operand.hbm [shape: f32[384,128], index: 5, kind: output, shape index: {}]
  %s6 = sld [smem:[#allocation0]]
  $region42: #{tpu_custom_call.1} parent=0
    _
  %s8 = ssub.s32 1, %s6
  %s9 = scalar_select 0, %s8, %s6
  $region1: #{tpu_custom_call.1} parent=0
    #allocation2 [shape = 'u8[294912]{0}', space=vmem, size = 0x48000, scoped, tag = 'input window, operand 0, single buffered']
    #allocation3 [shape = 's32[1]{0}', space=sflag, size = 0x4, scoped, tag = 'scoped memory for tpu_custom_call.1']
    #allocation4 [shape = 's32[1]{0}', space=sflag, size = 0x4, scoped, tag = 'scoped memory for tpu_custom_call.1']
    #allocation5 [shape = 'u8[98304]{0}', space=vmem, size = 0x18000, scoped, tag = 'input window, operand 1, single buffered']
    #allocation6 [shape = 's32[1]{0}', space=sflag, size = 0x4, scoped, tag = 'scoped memory for tpu_custom_call.1']
    #allocation7 [shape = 'u8[196608]{0}', space=vmem, size = 0x30000, scoped, tag = 'input window, operand 2, single buffered']
    #allocation8 [shape = 'u8[196608]{0}', space=vmem, size = 0x30000, scoped, tag = 'output window, operand 0, single buffered']
    %10 = vsyncpa [#allocation3], 0
    %11 = vsyncpa [#allocation6], 0
    %12 = vsyncpa [#allocation4], 0
    // Predicated region
    $region2: #{tpu_custom_call.1} parent=1 // pred_check
      _
    $region3: #{tpu_custom_call.1} parent=1 // pred_check_branch
      %14 = sbr.rel (0) target = $region5
    $region4: #{tpu_custom_call.1} parent=1 // pred_region
      %s16 = ssub.s32 9216, 9216
      %17 = vsyncadd [#allocation3], %s16
      %s18 = sshll.u32 [#allocation2], 4
      %s19 = int_to_ptr.vmem [resolvable:$true] %s18
      %24 = dma.hbm_to_vmem [thread:$0]  %s0, 9216, %s19, [#allocation3], 192, 192, 12
    $region5: #{tpu_custom_call.1} parent=1 // pred_fallthru
      _
    // Predicated region
    $region6: #{tpu_custom_call.1} parent=1 // pred_check
      _
    $region7: #{tpu_custom_call.1} parent=1 // pred_check_branch
      %26 = sbr.rel (0) target = $region9
    $region8: #{tpu_custom_call.1} parent=1 // pred_region
      %s28 = ssub.s32 3072, 3072
      %29 = vsyncadd [#allocation6], %s28
      %s30 = sshll.u32 [#allocation5], 4
      %s31 = int_to_ptr.vmem [resolvable:$true] %s30
      %36 = dma.hbm_to_vmem [thread:$0]  %s1, 3072, %s31, [#allocation6], 64, 64, 4
    $region9: #{tpu_custom_call.1} parent=1 // pred_fallthru
      _
    // Predicated region
    $region10: #{tpu_custom_call.1} parent=1 // pred_check
      _
    $region11: #{tpu_custom_call.1} parent=1 // pred_check_branch
      %38 = sbr.rel (0) target = $region13
    $region12: #{tpu_custom_call.1} parent=1 // pred_region
      %s40 = ssub.s32 6144, 6144
      %41 = vsyncadd [#allocation6], %s40
      %s42 = sshll.u32 [#allocation7], 4
      %s43 = int_to_ptr.vmem [resolvable:$true] %s42
      %48 = dma.hbm_to_vmem [thread:$0]  %s2, 6144, %s43, [#allocation6], 128, 128, 8
    $region13: #{tpu_custom_call.1} parent=1 // pred_fallthru
      _
    // Predicated region
    $region14: #{tpu_custom_call.1} parent=1 // pred_check
      _
    $region15: #{tpu_custom_call.1} parent=1 // pred_check_branch
      %50 = sbr.rel (0) target = $region17
    $region16: #{tpu_custom_call.1} parent=1 // pred_region
      _
    $region17: #{tpu_custom_call.1} parent=1 // pred_fallthru
      _
    // Predicated region
    $region18: #{tpu_custom_call.1} parent=1 // pred_check
      _
    $region19: #{tpu_custom_call.1} parent=1 // pred_check_branch
      %52 = sbr.rel (0) target = $region21
    $region20: #{tpu_custom_call.1} parent=1 // pred_region
      _
    $region21: #{tpu_custom_call.1} parent=1 // pred_fallthru
      _
    // Predicated region
    $region22: #{tpu_custom_call.1} parent=1 // pred_check
      _
    $region23: #{tpu_custom_call.1} parent=1 // pred_check_branch
      %54 = sbr.rel (0) target = $region25
    $region24: #{tpu_custom_call.1} parent=1 // pred_region
      %55 = dma.done [#allocation3], 9216
    $region25: #{tpu_custom_call.1} parent=1 // pred_fallthru
      _
    // Predicated region
    $region26: #{tpu_custom_call.1} parent=1 // pred_check
      _
    $region27: #{tpu_custom_call.1} parent=1 // pred_check_branch
      %57 = sbr.rel (0) target = $region29
    $region28: #{tpu_custom_call.1} parent=1 // pred_region
      %58 = dma.done [#allocation6], 3072
    $region29: #{tpu_custom_call.1} parent=1 // pred_fallthru
      _
    // Predicated region
    $region30: #{tpu_custom_call.1} parent=1 // pred_check
      _
    $region31: #{tpu_custom_call.1} parent=1 // pred_check_branch
      %60 = sbr.rel (0) target = $region33
    $region32: #{tpu_custom_call.1} parent=1 // pred_region
      %61 = dma.done [#allocation6], 6144
    $region33: #{tpu_custom_call.1} parent=1 // pred_fallthru
      _
    %v63 = vld [vmem:[#allocation2] sm:$0xff]
    %v64 = vld [vmem:[#allocation2 + $0x8] sm:$0xf]
    %v65 = vld [vmem:[#allocation2 + $0xc] sm:$0xff]
    %v66 = vld [vmem:[#allocation2 + $0x14] sm:$0xf]
    %v67 = vld [vmem:[#allocation2 + $0x18] sm:$0xff]
    %v68 = vld [vmem:[#allocation2 + $0x20] sm:$0xf]
    %v69 = vld [vmem:[#allocation2 + $0x24] sm:$0xff]
    %v70 = vld [vmem:[#allocation2 + $0x2c] sm:$0xf]
    %v71 = vld [vmem:[#allocation2 + $0x30] sm:$0xff]
    %v72 = vld [vmem:[#allocation2 + $0x38] sm:$0xf]
    %v73 = vld [vmem:[#allocation2 + $0x3c] sm:$0xff]
    %v74 = vld [vmem:[#allocation2 + $0x44] sm:$0xf]
    %v75 = vld [vmem:[#allocation2 + $0x48] sm:$0xff]
    %v76 = vld [vmem:[#allocation2 + $0x50] sm:$0xf]
    %v77 = vld [vmem:[#allocation2 + $0x54] sm:$0xff]
    %v78 = vld [vmem:[#allocation2 + $0x5c] sm:$0xf]
    %v79 = vld [vmem:[#allocation2 + $0x60] sm:$0xff]
    %v80 = vld [vmem:[#allocation2 + $0x68] sm:$0xf]
    %v81 = vld [vmem:[#allocation2 + $0x6c] sm:$0xff]
    %v82 = vld [vmem:[#allocation2 + $0x74] sm:$0xf]
    %v83 = vld [vmem:[#allocation2 + $0x78] sm:$0xff]
    %v84 = vld [vmem:[#allocation2 + $0x80] sm:$0xf]
    %v85 = vld [vmem:[#allocation2 + $0x84] sm:$0xff]
    %v86 = vld [vmem:[#allocation2 + $0x8c] sm:$0xf]
    %v87 = vld [vmem:[#allocation2 + $0x90] sm:$0xff]
    %v88 = vld [vmem:[#allocation2 + $0x98] sm:$0xf]
    %v89 = vld [vmem:[#allocation2 + $0x9c] sm:$0xff]
    %v90 = vld [vmem:[#allocation2 + $0xa4] sm:$0xf]
    %v91 = vld [vmem:[#allocation2 + $0xa8] sm:$0xff]
    %v92 = vld [vmem:[#allocation2 + $0xb0] sm:$0xf]
    %v93 = vld [vmem:[#allocation2 + $0xb4] sm:$0xff]
    %v94 = vld [vmem:[#allocation2 + $0xbc] sm:$0xf]
    %v95 = vld [vmem:[#allocation2 + $0xc0] sm:$0xff]
    %v96 = vld [vmem:[#allocation2 + $0xc8] sm:$0xf]
    %v97 = vld [vmem:[#allocation2 + $0xcc] sm:$0xff]
    %v98 = vld [vmem:[#allocation2 + $0xd4] sm:$0xf]
    %v99 = vld [vmem:[#allocation2 + $0xd8] sm:$0xff]
    %v100 = vld [vmem:[#allocation2 + $0xe0] sm:$0xf]
    %v101 = vld [vmem:[#allocation2 + $0xe4] sm:$0xff]
    %v102 = vld [vmem:[#allocation2 + $0xec] sm:$0xf]
    %v103 = vld [vmem:[#allocation2 + $0xf0] sm:$0xff]
    %v104 = vld [vmem:[#allocation2 + $0xf8] sm:$0xf]
    %v105 = vld [vmem:[#allocation2 + $0xfc] sm:$0xff]
    %v106 = vld [vmem:[#allocation2 + $0x104] sm:$0xf]
    %v107 = vld [vmem:[#allocation2 + $0x108] sm:$0xff]
    %v108 = vld [vmem:[#allocation2 + $0x110] sm:$0xf]
    %v109 = vld [vmem:[#allocation2 + $0x114] sm:$0xff]
    %v110 = vld [vmem:[#allocation2 + $0x11c] sm:$0xf]
    %v111 = vld [vmem:[#allocation2 + $0x120] sm:$0xff]
    %v112 = vld [vmem:[#allocation2 + $0x128] sm:$0xf]
    %v113 = vld [vmem:[#allocation2 + $0x12c] sm:$0xff]
    %v114 = vld [vmem:[#allocation2 + $0x134] sm:$0xf]
    %v115 = vld [vmem:[#allocation2 + $0x138] sm:$0xff]
    %v116 = vld [vmem:[#allocation2 + $0x140] sm:$0xf]
    %v117 = vld [vmem:[#allocation2 + $0x144] sm:$0xff]
    %v118 = vld [vmem:[#allocation2 + $0x14c] sm:$0xf]
    %v119 = vld [vmem:[#allocation2 + $0x150] sm:$0xff]
    %v120 = vld [vmem:[#allocation2 + $0x158] sm:$0xf]
    %v121 = vld [vmem:[#allocation2 + $0x15c] sm:$0xff]
    %v122 = vld [vmem:[#allocation2 + $0x164] sm:$0xf]
    %v123 = vld [vmem:[#allocation2 + $0x168] sm:$0xff]
    %v124 = vld [vmem:[#allocation2 + $0x170] sm:$0xf]
    %v125 = vld [vmem:[#allocation2 + $0x174] sm:$0xff]
    %v126 = vld [vmem:[#allocation2 + $0x17c] sm:$0xf]
    %v127 = vld [vmem:[#allocation2 + $0x180] sm:$0xff]
    %v128 = vld [vmem:[#allocation2 + $0x188] sm:$0xf]
    %v129 = vld [vmem:[#allocation2 + $0x18c] sm:$0xff]
    %v130 = vld [vmem:[#allocation2 + $0x194] sm:$0xf]
    %v131 = vld [vmem:[#allocation2 + $0x198] sm:$0xff]
    %v132 = vld [vmem:[#allocation2 + $0x1a0] sm:$0xf]
    %v133 = vld [vmem:[#allocation2 + $0x1a4] sm:$0xff]
    %v134 = vld [vmem:[#allocation2 + $0x1ac] sm:$0xf]
    %v135 = vld [vmem:[#allocation2 + $0x1b0] sm:$0xff]
    %v136 = vld [vmem:[#allocation2 + $0x1b8] sm:$0xf]
    %v137 = vld [vmem:[#allocation2 + $0x1bc] sm:$0xff]
    %v138 = vld [vmem:[#allocation2 + $0x1c4] sm:$0xf]
    %v139 = vld [vmem:[#allocation2 + $0x1c8] sm:$0xff]
    %v140 = vld [vmem:[#allocation2 + $0x1d0] sm:$0xf]
    %v141 = vld [vmem:[#allocation2 + $0x1d4] sm:$0xff]
    %v142 = vld [vmem:[#allocation2 + $0x1dc] sm:$0xf]
    %v143 = vld [vmem:[#allocation2 + $0x1e0] sm:$0xff]
    %v144 = vld [vmem:[#allocation2 + $0x1e8] sm:$0xf]
    %v145 = vld [vmem:[#allocation2 + $0x1ec] sm:$0xff]
    %v146 = vld [vmem:[#allocation2 + $0x1f4] sm:$0xf]
    %v147 = vld [vmem:[#allocation2 + $0x1f8] sm:$0xff]
    %v148 = vld [vmem:[#allocation2 + $0x200] sm:$0xf]
    %v149 = vld [vmem:[#allocation2 + $0x204] sm:$0xff]
    %v150 = vld [vmem:[#allocation2 + $0x20c] sm:$0xf]
    %v151 = vld [vmem:[#allocation2 + $0x210] sm:$0xff]
    %v152 = vld [vmem:[#allocation2 + $0x218] sm:$0xf]
    %v153 = vld [vmem:[#allocation2 + $0x21c] sm:$0xff]
    %v154 = vld [vmem:[#allocation2 + $0x224] sm:$0xf]
    %v155 = vld [vmem:[#allocation2 + $0x228] sm:$0xff]
    %v156 = vld [vmem:[#allocation2 + $0x230] sm:$0xf]
    %v157 = vld [vmem:[#allocation2 + $0x234] sm:$0xff]
    %v158 = vld [vmem:[#allocation2 + $0x23c] sm:$0xf]
    %v159 = vld [vmem:[#allocation5] sm:$0xf]
    %v160 = vld [vmem:[#allocation5 + $0x4] sm:$0xf]
    %v161 = vld [vmem:[#allocation5 + $0x8] sm:$0xf]
    %v162 = vld [vmem:[#allocation5 + $0xc] sm:$0xf]
    %v163 = vld [vmem:[#allocation5 + $0x10] sm:$0xf]
    %v164 = vld [vmem:[#allocation5 + $0x14] sm:$0xf]
    %v165 = vld [vmem:[#allocation5 + $0x18] sm:$0xf]
    %v166 = vld [vmem:[#allocation5 + $0x1c] sm:$0xf]
    %v167 = vld [vmem:[#allocation5 + $0x20] sm:$0xf]
    %v168 = vld [vmem:[#allocation5 + $0x24] sm:$0xf]
    %v169 = vld [vmem:[#allocation5 + $0x28] sm:$0xf]
    %v170 = vld [vmem:[#allocation5 + $0x2c] sm:$0xf]
    %v171 = vld [vmem:[#allocation5 + $0x30] sm:$0xf]
    %v172 = vld [vmem:[#allocation5 + $0x34] sm:$0xf]
    %v173 = vld [vmem:[#allocation5 + $0x38] sm:$0xf]
    %v174 = vld [vmem:[#allocation5 + $0x3c] sm:$0xf]
    %v175 = vld [vmem:[#allocation5 + $0x40] sm:$0xf]
    %v176 = vld [vmem:[#allocation5 + $0x44] sm:$0xf]
    %v177 = vld [vmem:[#allocation5 + $0x48] sm:$0xf]
    %v178 = vld [vmem:[#allocation5 + $0x4c] sm:$0xf]
    %v179 = vld [vmem:[#allocation5 + $0x50] sm:$0xf]
    %v180 = vld [vmem:[#allocation5 + $0x54] sm:$0xf]
    %v181 = vld [vmem:[#allocation5 + $0x58] sm:$0xf]
    %v182 = vld [vmem:[#allocation5 + $0x5c] sm:$0xf]
    %v183 = vld [vmem:[#allocation5 + $0x60] sm:$0xf]
    %v184 = vld [vmem:[#allocation5 + $0x64] sm:$0xf]
    %v185 = vld [vmem:[#allocation5 + $0x68] sm:$0xf]
    %v186 = vld [vmem:[#allocation5 + $0x6c] sm:$0xf]
    %v187 = vld [vmem:[#allocation5 + $0x70] sm:$0xf]
    %v188 = vld [vmem:[#allocation5 + $0x74] sm:$0xf]
    %v189 = vld [vmem:[#allocation5 + $0x78] sm:$0xf]
    %v190 = vld [vmem:[#allocation5 + $0x7c] sm:$0xf]
    %v191 = vld [vmem:[#allocation5 + $0x80] sm:$0xf]
    %v192 = vld [vmem:[#allocation5 + $0x84] sm:$0xf]
    %v193 = vld [vmem:[#allocation5 + $0x88] sm:$0xf]
    %v194 = vld [vmem:[#allocation5 + $0x8c] sm:$0xf]
    %v195 = vld [vmem:[#allocation5 + $0x90] sm:$0xf]
    %v196 = vld [vmem:[#allocation5 + $0x94] sm:$0xf]
    %v197 = vld [vmem:[#allocation5 + $0x98] sm:$0xf]
    %v198 = vld [vmem:[#allocation5 + $0x9c] sm:$0xf]
    %v199 = vld [vmem:[#allocation5 + $0xa0] sm:$0xf]
    %v200 = vld [vmem:[#allocation5 + $0xa4] sm:$0xf]
    %v201 = vld [vmem:[#allocation5 + $0xa8] sm:$0xf]
    %v202 = vld [vmem:[#allocation5 + $0xac] sm:$0xf]
    %v203 = vld [vmem:[#allocation5 + $0xb0] sm:$0xf]
    %v204 = vld [vmem:[#allocation5 + $0xb4] sm:$0xf]
    %v205 = vld [vmem:[#allocation5 + $0xb8] sm:$0xf]
    %v206 = vld [vmem:[#allocation5 + $0xbc] sm:$0xf]
    %v303 = vunpack.c.l.b16 %v63
    %v304 = vunpack.c.h.b16 %v63
    %v305 = vunpack.c.l.b16 %v64
    %v306 = vunpack.c.l.b16 %v65
    %v307 = vunpack.c.h.b16 %v65
    %v308 = vunpack.c.l.b16 %v66
    %v309 = vunpack.c.l.b16 %v67
    %v310 = vunpack.c.h.b16 %v67
    %v311 = vunpack.c.l.b16 %v68
    %v312 = vunpack.c.l.b16 %v69
    %v313 = vunpack.c.h.b16 %v69
    %v314 = vunpack.c.l.b16 %v70
    %v315 = vunpack.c.l.b16 %v71
    %v316 = vunpack.c.h.b16 %v71
    %v317 = vunpack.c.l.b16 %v72
    %v318 = vunpack.c.l.b16 %v73
    %v319 = vunpack.c.h.b16 %v73
    %v320 = vunpack.c.l.b16 %v74
    %v321 = vunpack.c.l.b16 %v75
    %v322 = vunpack.c.h.b16 %v75
    %v323 = vunpack.c.l.b16 %v76
    %v324 = vunpack.c.l.b16 %v77
    %v325 = vunpack.c.h.b16 %v77
    %v326 = vunpack.c.l.b16 %v78
    %v327 = vunpack.c.l.b16 %v79
    %v328 = vunpack.c.h.b16 %v79
    %v329 = vunpack.c.l.b16 %v80
    %v330 = vunpack.c.l.b16 %v81
    %v331 = vunpack.c.h.b16 %v81
    %v332 = vunpack.c.l.b16 %v82
    %v333 = vunpack.c.l.b16 %v83
    %v334 = vunpack.c.h.b16 %v83
    %v335 = vunpack.c.l.b16 %v84
    %v336 = vunpack.c.l.b16 %v85
    %v337 = vunpack.c.h.b16 %v85
    %v338 = vunpack.c.l.b16 %v86
    %v339 = vunpack.c.l.b16 %v87
    %v340 = vunpack.c.h.b16 %v87
    %v341 = vunpack.c.l.b16 %v88
    %v342 = vunpack.c.l.b16 %v89
    %v343 = vunpack.c.h.b16 %v89
    %v344 = vunpack.c.l.b16 %v90
    %v345 = vunpack.c.l.b16 %v91
    %v346 = vunpack.c.h.b16 %v91
    %v347 = vunpack.c.l.b16 %v92
    %v348 = vunpack.c.l.b16 %v93
    %v349 = vunpack.c.h.b16 %v93
    %v350 = vunpack.c.l.b16 %v94
    %v351 = vunpack.c.l.b16 %v95
    %v352 = vunpack.c.h.b16 %v95
    %v353 = vunpack.c.l.b16 %v96
    %v354 = vunpack.c.l.b16 %v97
    %v355 = vunpack.c.h.b16 %v97
    %v356 = vunpack.c.l.b16 %v98
    %v357 = vunpack.c.l.b16 %v99
    %v358 = vunpack.c.h.b16 %v99
    %v359 = vunpack.c.l.b16 %v100
    %v360 = vunpack.c.l.b16 %v101
    %v361 = vunpack.c.h.b16 %v101
    %v362 = vunpack.c.l.b16 %v102
    %v363 = vunpack.c.l.b16 %v103
    %v364 = vunpack.c.h.b16 %v103
    %v365 = vunpack.c.l.b16 %v104
    %v366 = vunpack.c.l.b16 %v105
    %v367 = vunpack.c.h.b16 %v105
    %v368 = vunpack.c.l.b16 %v106
    %v369 = vunpack.c.l.b16 %v107
    %v370 = vunpack.c.h.b16 %v107
    %v371 = vunpack.c.l.b16 %v108
    %v372 = vunpack.c.l.b16 %v109
    %v373 = vunpack.c.h.b16 %v109
    %v374 = vunpack.c.l.b16 %v110
    %v375 = vunpack.c.l.b16 %v111
    %v376 = vunpack.c.h.b16 %v111
    %v377 = vunpack.c.l.b16 %v112
    %v378 = vunpack.c.l.b16 %v113
    %v379 = vunpack.c.h.b16 %v113
    %v380 = vunpack.c.l.b16 %v114
    %v381 = vunpack.c.l.b16 %v115
    %v382 = vunpack.c.h.b16 %v115
    %v383 = vunpack.c.l.b16 %v116
    %v384 = vunpack.c.l.b16 %v117
    %v385 = vunpack.c.h.b16 %v117
    %v386 = vunpack.c.l.b16 %v118
    %v387 = vunpack.c.l.b16 %v119
    %v388 = vunpack.c.h.b16 %v119
    %v389 = vunpack.c.l.b16 %v120
    %v390 = vunpack.c.l.b16 %v121
    %v391 = vunpack.c.h.b16 %v121
    %v392 = vunpack.c.l.b16 %v122
    %v393 = vunpack.c.l.b16 %v123
    %v394 = vunpack.c.h.b16 %v123
    %v395 = vunpack.c.l.b16 %v124
    %v396 = vunpack.c.l.b16 %v125
    %v397 = vunpack.c.h.b16 %v125
    %v398 = vunpack.c.l.b16 %v126
    %v399 = vunpack.c.l.b16 %v127
    %v400 = vunpack.c.h.b16 %v127
    %v401 = vunpack.c.l.b16 %v128
    %v402 = vunpack.c.l.b16 %v129
    %v403 = vunpack.c.h.b16 %v129
    %v404 = vunpack.c.l.b16 %v130
    %v405 = vunpack.c.l.b16 %v131
    %v406 = vunpack.c.h.b16 %v131
    %v407 = vunpack.c.l.b16 %v132
    %v408 = vunpack.c.l.b16 %v133
    %v409 = vunpack.c.h.b16 %v133
    %v410 = vunpack.c.l.b16 %v134
    %v411 = vunpack.c.l.b16 %v135
    %v412 = vunpack.c.h.b16 %v135
    %v413 = vunpack.c.l.b16 %v136
    %v414 = vunpack.c.l.b16 %v137
    %v415 = vunpack.c.h.b16 %v137
    %v416 = vunpack.c.l.b16 %v138
    %v417 = vunpack.c.l.b16 %v139
    %v418 = vunpack.c.h.b16 %v139
    %v419 = vunpack.c.l.b16 %v140
    %v420 = vunpack.c.l.b16 %v141
    %v421 = vunpack.c.h.b16 %v141
    %v422 = vunpack.c.l.b16 %v142
    %v423 = vunpack.c.l.b16 %v143
    %v424 = vunpack.c.h.b16 %v143
    %v425 = vunpack.c.l.b16 %v144
    %v426 = vunpack.c.l.b16 %v145
    %v427 = vunpack.c.h.b16 %v145
    %v428 = vunpack.c.l.b16 %v146
    %v429 = vunpack.c.l.b16 %v147
    %v430 = vunpack.c.h.b16 %v147
    %v431 = vunpack.c.l.b16 %v148
    %v432 = vunpack.c.l.b16 %v149
    %v433 = vunpack.c.h.b16 %v149
    %v434 = vunpack.c.l.b16 %v150
    %v435 = vunpack.c.l.b16 %v151
    %v436 = vunpack.c.h.b16 %v151
    %v437 = vunpack.c.l.b16 %v152
    %v438 = vunpack.c.l.b16 %v153
    %v439 = vunpack.c.h.b16 %v153
    %v440 = vunpack.c.l.b16 %v154
    %v441 = vunpack.c.l.b16 %v155
    %v442 = vunpack.c.h.b16 %v155
    %v443 = vunpack.c.l.b16 %v156
    %v444 = vunpack.c.l.b16 %v157
    %v445 = vunpack.c.h.b16 %v157
    %v446 = vunpack.c.l.b16 %v158
    %v447 = vpack.c.b16 %v306, %v303
    %v448 = vpack.c.b16 %v307, %v304
    %v449 = vpack.c.b16 %v308, %v305
    %v450 = vpack.c.b16 %v312, %v309
    %v451 = vpack.c.b16 %v313, %v310
    %v452 = vpack.c.b16 %v314, %v311
    %v453 = vpack.c.b16 %v318, %v315
    %v454 = vpack.c.b16 %v319, %v316
    %v455 = vpack.c.b16 %v320, %v317
    %v456 = vpack.c.b16 %v324, %v321
    %v457 = vpack.c.b16 %v325, %v322
    %v458 = vpack.c.b16 %v326, %v323
    %v459 = vpack.c.b16 %v330, %v327
    %v460 = vpack.c.b16 %v331, %v328
    %v461 = vpack.c.b16 %v332, %v329
    %v462 = vpack.c.b16 %v336, %v333
    %v463 = vpack.c.b16 %v337, %v334
    %v464 = vpack.c.b16 %v338, %v335
    %v465 = vpack.c.b16 %v342, %v339
    %v466 = vpack.c.b16 %v343, %v340
    %v467 = vpack.c.b16 %v344, %v341
    %v468 = vpack.c.b16 %v348, %v345
    %v469 = vpack.c.b16 %v349, %v346
    %v470 = vpack.c.b16 %v350, %v347
    %v471 = vpack.c.b16 %v354, %v351
    %v472 = vpack.c.b16 %v355, %v352
    %v473 = vpack.c.b16 %v356, %v353
    %v474 = vpack.c.b16 %v360, %v357
    %v475 = vpack.c.b16 %v361, %v358
    %v476 = vpack.c.b16 %v362, %v359
    %v477 = vpack.c.b16 %v366, %v363
    %v478 = vpack.c.b16 %v367, %v364
    %v479 = vpack.c.b16 %v368, %v365
    %v480 = vpack.c.b16 %v372, %v369
    %v481 = vpack.c.b16 %v373, %v370
    %v482 = vpack.c.b16 %v374, %v371
    %v483 = vpack.c.b16 %v378, %v375
    %v484 = vpack.c.b16 %v379, %v376
    %v485 = vpack.c.b16 %v380, %v377
    %v486 = vpack.c.b16 %v384, %v381
    %v487 = vpack.c.b16 %v385, %v382
    %v488 = vpack.c.b16 %v386, %v383
    %v489 = vpack.c.b16 %v390, %v387
    %v490 = vpack.c.b16 %v391, %v388
    %v491 = vpack.c.b16 %v392, %v389
    %v492 = vpack.c.b16 %v396, %v393
    %v493 = vpack.c.b16 %v397, %v394
    %v494 = vpack.c.b16 %v398, %v395
    %v495 = vpack.c.b16 %v402, %v399
    %v496 = vpack.c.b16 %v403, %v400
    %v497 = vpack.c.b16 %v404, %v401
    %v498 = vpack.c.b16 %v408, %v405
    %v499 = vpack.c.b16 %v409, %v406
    %v500 = vpack.c.b16 %v410, %v407
    %v501 = vpack.c.b16 %v414, %v411
    %v502 = vpack.c.b16 %v415, %v412
    %v503 = vpack.c.b16 %v416, %v413
    %v504 = vpack.c.b16 %v420, %v417
    %v505 = vpack.c.b16 %v421, %v418
    %v506 = vpack.c.b16 %v422, %v419
    %v507 = vpack.c.b16 %v426, %v423
    %v508 = vpack.c.b16 %v427, %v424
    %v509 = vpack.c.b16 %v428, %v425
    %v510 = vpack.c.b16 %v432, %v429
    %v511 = vpack.c.b16 %v433, %v430
    %v512 = vpack.c.b16 %v434, %v431
    %v513 = vpack.c.b16 %v438, %v435
    %v514 = vpack.c.b16 %v439, %v436
    %v515 = vpack.c.b16 %v440, %v437
    %v516 = vpack.c.b16 %v444, %v441
    %v517 = vpack.c.b16 %v445, %v442
    %v518 = vpack.c.b16 %v446, %v443
    %v639 = vunpack.c.l.b16 %v159
    %v640 = vunpack.c.l.b16 %v160
    %v641 = vunpack.c.l.b16 %v161
    %v642 = vunpack.c.l.b16 %v162
    %v643 = vunpack.c.l.b16 %v163
    %v644 = vunpack.c.l.b16 %v164
    %v645 = vunpack.c.l.b16 %v165
    %v646 = vunpack.c.l.b16 %v166
    %v647 = vunpack.c.l.b16 %v167
    %v648 = vunpack.c.l.b16 %v168
    %v649 = vunpack.c.l.b16 %v169
    %v650 = vunpack.c.l.b16 %v170
    %v651 = vunpack.c.l.b16 %v171
    %v652 = vunpack.c.l.b16 %v172
    %v653 = vunpack.c.l.b16 %v173
    %v654 = vunpack.c.l.b16 %v174
    %v655 = vunpack.c.l.b16 %v175
    %v656 = vunpack.c.l.b16 %v176
    %v657 = vunpack.c.l.b16 %v177
    %v658 = vunpack.c.l.b16 %v178
    %v659 = vunpack.c.l.b16 %v179
    %v660 = vunpack.c.l.b16 %v180
    %v661 = vunpack.c.l.b16 %v181
    %v662 = vunpack.c.l.b16 %v182
    %v663 = vunpack.c.l.b16 %v183
    %v664 = vunpack.c.l.b16 %v184
    %v665 = vunpack.c.l.b16 %v185
    %v666 = vunpack.c.l.b16 %v186
    %v667 = vunpack.c.l.b16 %v187
    %v668 = vunpack.c.l.b16 %v188
    %v669 = vunpack.c.l.b16 %v189
    %v670 = vunpack.c.l.b16 %v190
    %v671 = vunpack.c.l.b16 %v191
    %v672 = vunpack.c.l.b16 %v192
    %v673 = vunpack.c.l.b16 %v193
    %v674 = vunpack.c.l.b16 %v194
    %v675 = vunpack.c.l.b16 %v195
    %v676 = vunpack.c.l.b16 %v196
    %v677 = vunpack.c.l.b16 %v197
    %v678 = vunpack.c.l.b16 %v198
    %v679 = vunpack.c.l.b16 %v199
    %v680 = vunpack.c.l.b16 %v200
    %v681 = vunpack.c.l.b16 %v201
    %v682 = vunpack.c.l.b16 %v202
    %v683 = vunpack.c.l.b16 %v203
    %v684 = vunpack.c.l.b16 %v204
    %v685 = vunpack.c.l.b16 %v205
    %v686 = vunpack.c.l.b16 %v206
    %v687 = vpack.c.b16 %v640, %v639
    %v688 = vpack.c.b16 %v642, %v641
    %v689 = vpack.c.b16 %v644, %v643
    %v690 = vpack.c.b16 %v646, %v645
    %v691 = vpack.c.b16 %v648, %v647
    %v692 = vpack.c.b16 %v650, %v649
    %v693 = vpack.c.b16 %v652, %v651
    %v694 = vpack.c.b16 %v654, %v653
    %v695 = vpack.c.b16 %v656, %v655
    %v696 = vpack.c.b16 %v658, %v657
    %v697 = vpack.c.b16 %v660, %v659
    %v698 = vpack.c.b16 %v662, %v661
    %v699 = vpack.c.b16 %v664, %v663
    %v700 = vpack.c.b16 %v666, %v665
    %v701 = vpack.c.b16 %v668, %v667
    %v702 = vpack.c.b16 %v670, %v669
    %v703 = vpack.c.b16 %v672, %v671
    %v704 = vpack.c.b16 %v674, %v673
    %v705 = vpack.c.b16 %v676, %v675
    %v706 = vpack.c.b16 %v678, %v677
    %v707 = vpack.c.b16 %v680, %v679
    %v708 = vpack.c.b16 %v682, %v681
    %v709 = vpack.c.b16 %v684, %v683
    %v710 = vpack.c.b16 %v686, %v685
    %735 = vmatprep.subr.bf16.mxu0 0
    %736 = vmatpush1.bf16.msra.mxu0 %v687
    %737 = vmatprep.subr.bf16.mxu0 0
    %738 = vmatpush1.bf16.msra.mxu0 %v688
    %739 = vmatprep.subr.bf16.mxu0 0
    %740 = vmatpush1.bf16.msra.mxu0 %v689
    %741 = vmatprep.subr.bf16.mxu0 0
    %742 = vmatpush1.bf16.msra.mxu0 %v690
    %743 = vmatprep.subr.bf16.mxu0 0
    %744 = vmatpush1.bf16.msra.mxu0 %v691
    %745 = vmatprep.subr.bf16.mxu0 0
    %746 = vmatpush1.bf16.msra.mxu0 %v692
    %747 = vmatprep.subr.bf16.mxu0 0
    %748 = vmatpush1.bf16.msra.mxu0 %v693
    %749 = vmatprep.subr.bf16.mxu0 0
    %750 = vmatpush1.bf16.msra.mxu0 %v694
    %751 = vmatprep.subr.bf16.mxu0 0
    %752 = vmatpush1.bf16.msra.mxu0 %v695
    %753 = vmatprep.subr.bf16.mxu0 0
    %754 = vmatpush1.bf16.msra.mxu0 %v696
    %755 = vmatprep.subr.bf16.mxu0 0
    %756 = vmatpush1.bf16.msra.mxu0 %v697
    %757 = vmatprep.subr.bf16.mxu0 0
    %758 = vmatpush1.bf16.msra.mxu0 %v698
    %759 = vmatprep.subr.bf16.mxu0 0
    %760 = vmatpush1.bf16.msra.mxu0 %v699
    %761 = vmatprep.subr.bf16.mxu0 0
    %762 = vmatpush1.bf16.msra.mxu0 %v700
    %763 = vmatprep.subr.bf16.mxu0 0
    %764 = vmatpush1.bf16.msra.mxu0 %v701
    %765 = vmatprep.subr.bf16.mxu0 0
    %766 = vmatpush1.bf16.msra.mxu0 %v702
    %767 = vmatprep.mubr.bf16.mxu0 %v448
    %768 = vmatmul.mubr.bf16.gmra.mrb[0].mxu0 %v447
    %v769 = vpop.f32.mrb[0].mxu0
    %v770 = vadd.f32 0.0, %v769
    %v771 = vpop.f32.mrb[0].mxu0
    %v772 = vpop.f32.mrb[0].mxu0
    %v773 = vadd.f32 0.0, %v772
    %v774 = vpop.f32.mrb[0].mxu0
    %775 = vmatprep.mubr.bf16.mxu0 %v451
    %776 = vmatmul.mubr.bf16.gmra.mrb[0].mxu0 %v450
    %v777 = vpop.f32.mrb[0].mxu0
    %v778 = vadd.f32 0.0, %v777
    %v779 = vpop.f32.mrb[0].mxu0
    %v780 = vpop.f32.mrb[0].mxu0
    %v781 = vadd.f32 0.0, %v780
    %v782 = vpop.f32.mrb[0].mxu0
    %783 = vmatprep.mubr.bf16.mxu0 %v454
    %784 = vmatmul.mubr.bf16.gmra.mrb[0].mxu0 %v453
    %v785 = vpop.f32.mrb[0].mxu0
    %v786 = vadd.f32 0.0, %v785
    %v787 = vpop.f32.mrb[0].mxu0
    %v788 = vpop.f32.mrb[0].mxu0
    %v789 = vadd.f32 0.0, %v788
    %v790 = vpop.f32.mrb[0].mxu0
    %791 = vmatprep.mubr.bf16.mxu0 %v457
    %792 = vmatmul.mubr.bf16.gmra.mrb[0].mxu0 %v456
    %v793 = vpop.f32.mrb[0].mxu0
    %v794 = vadd.f32 0.0, %v793
    %v795 = vpop.f32.mrb[0].mxu0
    %v796 = vpop.f32.mrb[0].mxu0
    %v797 = vadd.f32 0.0, %v796
    %v798 = vpop.f32.mrb[0].mxu0
    %799 = vmatprep.mubr.bf16.mxu0 %v460
    %800 = vmatmul.mubr.bf16.gmra.mrb[0].mxu0 %v459
    %v801 = vpop.f32.mrb[0].mxu0
    %v802 = vadd.f32 0.0, %v801
    %v803 = vpop.f32.mrb[0].mxu0
    %v804 = vpop.f32.mrb[0].mxu0
    %v805 = vadd.f32 0.0, %v804
    %v806 = vpop.f32.mrb[0].mxu0
    %807 = vmatprep.mubr.bf16.mxu0 %v463
    %808 = vmatmul.mubr.bf16.gmra.mrb[0].mxu0 %v462
    %v809 = vpop.f32.mrb[0].mxu0
    %v810 = vadd.f32 0.0, %v809
    %v811 = vpop.f32.mrb[0].mxu0
    %v812 = vpop.f32.mrb[0].mxu0
    %v813 = vadd.f32 0.0, %v812
    %v814 = vpop.f32.mrb[0].mxu0
    %815 = vmatprep.mubr.bf16.mxu0 %v466
    %816 = vmatmul.mubr.bf16.gmra.mrb[0].mxu0 %v465
    %v817 = vpop.f32.mrb[0].mxu0
    %v818 = vadd.f32 0.0, %v817
    %v819 = vpop.f32.mrb[0].mxu0
    %v820 = vpop.f32.mrb[0].mxu0
    %v821 = vadd.f32 0.0, %v820
    %v822 = vpop.f32.mrb[0].mxu0
    %823 = vmatprep.mubr.bf16.mxu0 %v469
    %824 = vmatmul.mubr.bf16.gmra.mrb[0].mxu0 %v468
    %v825 = vpop.f32.mrb[0].mxu0
    %v826 = vadd.f32 0.0, %v825
    %v827 = vpop.f32.mrb[0].mxu0
    %v828 = vpop.f32.mrb[0].mxu0
    %v829 = vadd.f32 0.0, %v828
    %v830 = vpop.f32.mrb[0].mxu0
    %831 = vmatprep.mubr.bf16.mxu0 %v472
    %832 = vmatmul.mubr.bf16.gmra.mrb[0].mxu0 %v471
    %v833 = vpop.f32.mrb[0].mxu0
    %v834 = vadd.f32 0.0, %v833
    %v835 = vpop.f32.mrb[0].mxu0
    %v836 = vpop.f32.mrb[0].mxu0
    %v837 = vadd.f32 0.0, %v836
    %v838 = vpop.f32.mrb[0].mxu0
    %839 = vmatprep.mubr.bf16.mxu0 %v475
    %840 = vmatmul.mubr.bf16.gmra.mrb[0].mxu0 %v474
    %v841 = vpop.f32.mrb[0].mxu0
    %v842 = vadd.f32 0.0, %v841
    %v843 = vpop.f32.mrb[0].mxu0
    %v844 = vpop.f32.mrb[0].mxu0
    %v845 = vadd.f32 0.0, %v844
    %v846 = vpop.f32.mrb[0].mxu0
    %847 = vmatprep.mubr.bf16.mxu0 %v478
    %848 = vmatmul.mubr.bf16.gmra.mrb[0].mxu0 %v477
    %v849 = vpop.f32.mrb[0].mxu0
    %v850 = vadd.f32 0.0, %v849
    %v851 = vpop.f32.mrb[0].mxu0
    %v852 = vpop.f32.mrb[0].mxu0
    %v853 = vadd.f32 0.0, %v852
    %v854 = vpop.f32.mrb[0].mxu0
    %855 = vmatprep.mubr.bf16.mxu0 %v481
    %856 = vmatmul.mubr.bf16.gmra.mrb[0].mxu0 %v480
    %v857 = vpop.f32.mrb[0].mxu0
    %v858 = vadd.f32 0.0, %v857
    %v859 = vpop.f32.mrb[0].mxu0
    %v860 = vpop.f32.mrb[0].mxu0
    %v861 = vadd.f32 0.0, %v860
    %v862 = vpop.f32.mrb[0].mxu0
    %863 = vmatprep.mubr.bf16.mxu0 %v484
    %864 = vmatmul.mubr.bf16.gmra.mrb[0].mxu0 %v483
    %v865 = vpop.f32.mrb[0].mxu0
    %v866 = vadd.f32 0.0, %v865
    %v867 = vpop.f32.mrb[0].mxu0
    %v868 = vpop.f32.mrb[0].mxu0
    %v869 = vadd.f32 0.0, %v868
    %v870 = vpop.f32.mrb[0].mxu0
    %871 = vmatprep.mubr.bf16.mxu0 %v487
    %872 = vmatmul.mubr.bf16.gmra.mrb[0].mxu0 %v486
    %v873 = vpop.f32.mrb[0].mxu0
    %v874 = vadd.f32 0.0, %v873
    %v875 = vpop.f32.mrb[0].mxu0
    %v876 = vpop.f32.mrb[0].mxu0
    %v877 = vadd.f32 0.0, %v876
    %v878 = vpop.f32.mrb[0].mxu0
    %879 = vmatprep.mubr.bf16.mxu0 %v490
    %880 = vmatmul.mubr.bf16.gmra.mrb[0].mxu0 %v489
    %v881 = vpop.f32.mrb[0].mxu0
    %v882 = vadd.f32 0.0, %v881
    %v883 = vpop.f32.mrb[0].mxu0
    %v884 = vpop.f32.mrb[0].mxu0
    %v885 = vadd.f32 0.0, %v884
    %v886 = vpop.f32.mrb[0].mxu0
    %887 = vmatprep.mubr.bf16.mxu0 %v493
    %888 = vmatmul.mubr.bf16.gmra.mrb[0].mxu0 %v492
    %v889 = vpop.f32.mrb[0].mxu0
    %v890 = vadd.f32 0.0, %v889
    %v891 = vpop.f32.mrb[0].mxu0
    %v892 = vpop.f32.mrb[0].mxu0
    %v893 = vadd.f32 0.0, %v892
    %v894 = vpop.f32.mrb[0].mxu0
    %895 = vmatprep.mubr.bf16.mxu0 %v496
    %896 = vmatmul.mubr.bf16.gmra.mrb[0].mxu0 %v495
    %v897 = vpop.f32.mrb[0].mxu0
    %v898 = vadd.f32 0.0, %v897
    %v899 = vpop.f32.mrb[0].mxu0
    %v900 = vpop.f32.mrb[0].mxu0
    %v901 = vadd.f32 0.0, %v900
    %v902 = vpop.f32.mrb[0].mxu0
    %903 = vmatprep.mubr.bf16.mxu0 %v499
    %904 = vmatmul.mubr.bf16.gmra.mrb[0].mxu0 %v498
    %v905 = vpop.f32.mrb[0].mxu0
    %v906 = vadd.f32 0.0, %v905
    %v907 = vpop.f32.mrb[0].mxu0
    %v908 = vpop.f32.mrb[0].mxu0
    %v909 = vadd.f32 0.0, %v908
    %v910 = vpop.f32.mrb[0].mxu0
    %911 = vmatprep.mubr.bf16.mxu0 %v502
    %912 = vmatmul.mubr.bf16.gmra.mrb[0].mxu0 %v501
    %v913 = vpop.f32.mrb[0].mxu0
    %v914 = vadd.f32 0.0, %v913
    %v915 = vpop.f32.mrb[0].mxu0
    %v916 = vpop.f32.mrb[0].mxu0
    %v917 = vadd.f32 0.0, %v916
    %v918 = vpop.f32.mrb[0].mxu0
    %919 = vmatprep.mubr.bf16.mxu0 %v505
    %920 = vmatmul.mubr.bf16.gmra.mrb[0].mxu0 %v504
    %v921 = vpop.f32.mrb[0].mxu0
    %v922 = vadd.f32 0.0, %v921
    %v923 = vpop.f32.mrb[0].mxu0
    %v924 = vpop.f32.mrb[0].mxu0
    %v925 = vadd.f32 0.0, %v924
    %v926 = vpop.f32.mrb[0].mxu0
    %927 = vmatprep.mubr.bf16.mxu0 %v508
    %928 = vmatmul.mubr.bf16.gmra.mrb[0].mxu0 %v507
    %v929 = vpop.f32.mrb[0].mxu0
    %v930 = vadd.f32 0.0, %v929
    %v931 = vpop.f32.mrb[0].mxu0
    %v932 = vpop.f32.mrb[0].mxu0
    %v933 = vadd.f32 0.0, %v932
    %v934 = vpop.f32.mrb[0].mxu0
    %935 = vmatprep.mubr.bf16.mxu0 %v511
    %936 = vmatmul.mubr.bf16.gmra.mrb[0].mxu0 %v510
    %v937 = vpop.f32.mrb[0].mxu0
    %v938 = vadd.f32 0.0, %v937
    %v939 = vpop.f32.mrb[0].mxu0
    %v940 = vpop.f32.mrb[0].mxu0
    %v941 = vadd.f32 0.0, %v940
    %v942 = vpop.f32.mrb[0].mxu0
    %943 = vmatprep.mubr.bf16.mxu0 %v514
    %944 = vmatmul.mubr.bf16.gmra.mrb[0].mxu0 %v513
    %v945 = vpop.f32.mrb[0].mxu0
    %v946 = vadd.f32 0.0, %v945
    %v947 = vpop.f32.mrb[0].mxu0
    %v948 = vpop.f32.mrb[0].mxu0
    %v949 = vadd.f32 0.0, %v948
    %v950 = vpop.f32.mrb[0].mxu0
    %951 = vmatprep.mubr.bf16.mxu0 %v517
    %952 = vmatmul.mubr.bf16.gmra.mrb[0].mxu0 %v516
    %v953 = vpop.f32.mrb[0].mxu0
    %v954 = vadd.f32 0.0, %v953
    %v955 = vpop.f32.mrb[0].mxu0
    %v956 = vpop.f32.mrb[0].mxu0
    %v957 = vadd.f32 0.0, %v956
    %v958 = vpop.f32.mrb[0].mxu0
    %959 = vdwg.mxu0
    %960 = vmatprep.subr.bf16.mxu0 0
    %961 = vmatpush1.bf16.msra.mxu0 %v703
    %962 = vmatprep.subr.bf16.mxu0 0
    %963 = vmatpush1.bf16.msra.mxu0 %v704
    %964 = vmatprep.subr.bf16.mxu0 0
    %965 = vmatpush1.bf16.msra.mxu0 %v705
    %966 = vmatprep.subr.bf16.mxu0 0
    %967 = vmatpush1.bf16.msra.mxu0 %v706
    %968 = vmatprep.subr.bf16.mxu0 0
    %969 = vmatpush1.bf16.msra.mxu0 %v707
    %970 = vmatprep.subr.bf16.mxu0 0
    %971 = vmatpush1.bf16.msra.mxu0 %v708
    %972 = vmatprep.subr.bf16.mxu0 0
    %973 = vmatpush1.bf16.msra.mxu0 %v709
    %974 = vmatprep.subr.bf16.mxu0 0
    %975 = vmatpush1.bf16.msra.mxu0 %v710
    %976 = vmatprep.subr.bf16.mxu0 0
    %977 = vmatpush1.bf16.msra.mxu0 0
    %978 = vmatprep.subr.bf16.mxu0 0
    %979 = vmatpush1.bf16.msra.mxu0 0
    %980 = vmatprep.subr.bf16.mxu0 0
    %981 = vmatpush1.bf16.msra.mxu0 0
    %982 = vmatprep.subr.bf16.mxu0 0
    %983 = vmatpush1.bf16.msra.mxu0 0
    %984 = vmatprep.subr.bf16.mxu0 0
    %985 = vmatpush1.bf16.msra.mxu0 0
    %986 = vmatprep.subr.bf16.mxu0 0
    %987 = vmatpush1.bf16.msra.mxu0 0
    %988 = vmatprep.subr.bf16.mxu0 0
    %989 = vmatpush1.bf16.msra.mxu0 0
    %990 = vmatprep.subr.bf16.mxu0 0
    %991 = vmatpush1.bf16.msra.mxu0 0
    %992 = vmatprep.mubr.bf16.mxu0 0
    %993 = vmatmul.mubr.bf16.gmra.mrb[0].mxu0 %v449
    %v994 = vpop.f32.mrb[0].mxu0
    %v995 = vadd.f32 %v770, %v994
    %v996 = vpop.f32.mrb[0].mxu0
    %v997 = vpop.f32.mrb[0].mxu0
    %v998 = vadd.f32 %v773, %v997
    %v999 = vpop.f32.mrb[0].mxu0
    %1000 = vmatprep.mubr.bf16.mxu0 0
    %1001 = vmatmul.mubr.bf16.gmra.mrb[0].mxu0 %v452
    %v1002 = vpop.f32.mrb[0].mxu0
    %v1003 = vadd.f32 %v778, %v1002
    %v1004 = vpop.f32.mrb[0].mxu0
    %v1005 = vpop.f32.mrb[0].mxu0
    %v1006 = vadd.f32 %v781, %v1005
    %v1007 = vpop.f32.mrb[0].mxu0
    %1008 = vmatprep.mubr.bf16.mxu0 0
    %1009 = vmatmul.mubr.bf16.gmra.mrb[0].mxu0 %v455
    %v1010 = vpop.f32.mrb[0].mxu0
    %v1011 = vadd.f32 %v786, %v1010
    %v1012 = vpop.f32.mrb[0].mxu0
    %v1013 = vpop.f32.mrb[0].mxu0
    %v1014 = vadd.f32 %v789, %v1013
    %v1015 = vpop.f32.mrb[0].mxu0
    %1016 = vmatprep.mubr.bf16.mxu0 0
    %1017 = vmatmul.mubr.bf16.gmra.mrb[0].mxu0 %v458
    %v1018 = vpop.f32.mrb[0].mxu0
    %v1019 = vadd.f32 %v794, %v1018
    %v1020 = vpop.f32.mrb[0].mxu0
    %v1021 = vpop.f32.mrb[0].mxu0
    %v1022 = vadd.f32 %v797, %v1021
    %v1023 = vpop.f32.mrb[0].mxu0
    %1024 = vmatprep.mubr.bf16.mxu0 0
    %1025 = vmatmul.mubr.bf16.gmra.mrb[0].mxu0 %v461
    %v1026 = vpop.f32.mrb[0].mxu0
    %v1027 = vadd.f32 %v802, %v1026
    %v1028 = vpop.f32.mrb[0].mxu0
    %v1029 = vpop.f32.mrb[0].mxu0
    %v1030 = vadd.f32 %v805, %v1029
    %v1031 = vpop.f32.mrb[0].mxu0
    %1032 = vmatprep.mubr.bf16.mxu0 0
    %1033 = vmatmul.mubr.bf16.gmra.mrb[0].mxu0 %v464
    %v1034 = vpop.f32.mrb[0].mxu0
    %v1035 = vadd.f32 %v810, %v1034
    %v1036 = vpop.f32.mrb[0].mxu0
    %v1037 = vpop.f32.mrb[0].mxu0
    %v1038 = vadd.f32 %v813, %v1037
    %v1039 = vpop.f32.mrb[0].mxu0
    %1040 = vmatprep.mubr.bf16.mxu0 0
    %1041 = vmatmul.mubr.bf16.gmra.mrb[0].mxu0 %v467
    %v1042 = vpop.f32.mrb[0].mxu0
    %v1043 = vadd.f32 %v818, %v1042
    %v1044 = vpop.f32.mrb[0].mxu0
    %v1045 = vpop.f32.mrb[0].mxu0
    %v1046 = vadd.f32 %v821, %v1045
    %v1047 = vpop.f32.mrb[0].mxu0
    %1048 = vmatprep.mubr.bf16.mxu0 0
    %1049 = vmatmul.mubr.bf16.gmra.mrb[0].mxu0 %v470
    %v1050 = vpop.f32.mrb[0].mxu0
    %v1051 = vadd.f32 %v826, %v1050
    %v1052 = vpop.f32.mrb[0].mxu0
    %v1053 = vpop.f32.mrb[0].mxu0
    %v1054 = vadd.f32 %v829, %v1053
    %v1055 = vpop.f32.mrb[0].mxu0
    %1056 = vmatprep.mubr.bf16.mxu0 0
    %1057 = vmatmul.mubr.bf16.gmra.mrb[0].mxu0 %v473
    %v1058 = vpop.f32.mrb[0].mxu0
    %v1059 = vadd.f32 %v834, %v1058
    %v1060 = vpop.f32.mrb[0].mxu0
    %v1061 = vpop.f32.mrb[0].mxu0
    %v1062 = vadd.f32 %v837, %v1061
    %v1063 = vpop.f32.mrb[0].mxu0
    %1064 = vmatprep.mubr.bf16.mxu0 0
    %1065 = vmatmul.mubr.bf16.gmra.mrb[0].mxu0 %v476
    %v1066 = vpop.f32.mrb[0].mxu0
    %v1067 = vadd.f32 %v842, %v1066
    %v1068 = vpop.f32.mrb[0].mxu0
    %v1069 = vpop.f32.mrb[0].mxu0
    %v1070 = vadd.f32 %v845, %v1069
    %v1071 = vpop.f32.mrb[0].mxu0
    %1072 = vmatprep.mubr.bf16.mxu0 0
    %1073 = vmatmul.mubr.bf16.gmra.mrb[0].mxu0 %v479
    %v1074 = vpop.f32.mrb[0].mxu0
    %v1075 = vadd.f32 %v850, %v1074
    %v1076 = vpop.f32.mrb[0].mxu0
    %v1077 = vpop.f32.mrb[0].mxu0
    %v1078 = vadd.f32 %v853, %v1077
    %v1079 = vpop.f32.mrb[0].mxu0
    %1080 = vmatprep.mubr.bf16.mxu0 0
    %1081 = vmatmul.mubr.bf16.gmra.mrb[0].mxu0 %v482
    %v1082 = vpop.f32.mrb[0].mxu0
    %v1083 = vadd.f32 %v858, %v1082
    %v1084 = vpop.f32.mrb[0].mxu0
    %v1085 = vpop.f32.mrb[0].mxu0
    %v1086 = vadd.f32 %v861, %v1085
    %v1087 = vpop.f32.mrb[0].mxu0
    %1088 = vmatprep.mubr.bf16.mxu0 0
    %1089 = vmatmul.mubr.bf16.gmra.mrb[0].mxu0 %v485
    %v1090 = vpop.f32.mrb[0].mxu0
    %v1091 = vadd.f32 %v866, %v1090
    %v1092 = vpop.f32.mrb[0].mxu0
    %v1093 = vpop.f32.mrb[0].mxu0
    %v1094 = vadd.f32 %v869, %v1093
    %v1095 = vpop.f32.mrb[0].mxu0
    %1096 = vmatprep.mubr.bf16.mxu0 0
    %1097 = vmatmul.mubr.bf16.gmra.mrb[0].mxu0 %v488
    %v1098 = vpop.f32.mrb[0].mxu0
    %v1099 = vadd.f32 %v874, %v1098
    %v1100 = vpop.f32.mrb[0].mxu0
    %v1101 = vpop.f32.mrb[0].mxu0
    %v1102 = vadd.f32 %v877, %v1101
    %v1103 = vpop.f32.mrb[0].mxu0
    %1104 = vmatprep.mubr.bf16.mxu0 0
    %1105 = vmatmul.mubr.bf16.gmra.mrb[0].mxu0 %v491
    %v1106 = vpop.f32.mrb[0].mxu0
    %v1107 = vadd.f32 %v882, %v1106
    %v1108 = vpop.f32.mrb[0].mxu0
    %v1109 = vpop.f32.mrb[0].mxu0
    %v1110 = vadd.f32 %v885, %v1109
    %v1111 = vpop.f32.mrb[0].mxu0
    %1112 = vmatprep.mubr.bf16.mxu0 0
    %1113 = vmatmul.mubr.bf16.gmra.mrb[0].mxu0 %v494
    %v1114 = vpop.f32.mrb[0].mxu0
    %v1115 = vadd.f32 %v890, %v1114
    %v1116 = vpop.f32.mrb[0].mxu0
    %v1117 = vpop.f32.mrb[0].mxu0
    %v1118 = vadd.f32 %v893, %v1117
    %v1119 = vpop.f32.mrb[0].mxu0
    %1120 = vmatprep.mubr.bf16.mxu0 0
    %1121 = vmatmul.mubr.bf16.gmra.mrb[0].mxu0 %v497
    %v1122 = vpop.f32.mrb[0].mxu0
    %v1123 = vadd.f32 %v898, %v1122
    %v1124 = vpop.f32.mrb[0].mxu0
    %v1125 = vpop.f32.mrb[0].mxu0
    %v1126 = vadd.f32 %v901, %v1125
    %v1127 = vpop.f32.mrb[0].mxu0
    %1128 = vmatprep.mubr.bf16.mxu0 0
    %1129 = vmatmul.mubr.bf16.gmra.mrb[0].mxu0 %v500
    %v1130 = vpop.f32.mrb[0].mxu0
    %v1131 = vadd.f32 %v906, %v1130
    %v1132 = vpop.f32.mrb[0].mxu0
    %v1133 = vpop.f32.mrb[0].mxu0
    %v1134 = vadd.f32 %v909, %v1133
    %v1135 = vpop.f32.mrb[0].mxu0
    %1136 = vmatprep.mubr.bf16.mxu0 0
    %1137 = vmatmul.mubr.bf16.gmra.mrb[0].mxu0 %v503
    %v1138 = vpop.f32.mrb[0].mxu0
    %v1139 = vadd.f32 %v914, %v1138
    %v1140 = vpop.f32.mrb[0].mxu0
    %v1141 = vpop.f32.mrb[0].mxu0
    %v1142 = vadd.f32 %v917, %v1141
    %v1143 = vpop.f32.mrb[0].mxu0
    %1144 = vmatprep.mubr.bf16.mxu0 0
    %1145 = vmatmul.mubr.bf16.gmra.mrb[0].mxu0 %v506
    %v1146 = vpop.f32.mrb[0].mxu0
    %v1147 = vadd.f32 %v922, %v1146
    %v1148 = vpop.f32.mrb[0].mxu0
    %v1149 = vpop.f32.mrb[0].mxu0
    %v1150 = vadd.f32 %v925, %v1149
    %v1151 = vpop.f32.mrb[0].mxu0
    %1152 = vmatprep.mubr.bf16.mxu0 0
    %1153 = vmatmul.mubr.bf16.gmra.mrb[0].mxu0 %v509
    %v1154 = vpop.f32.mrb[0].mxu0
    %v1155 = vadd.f32 %v930, %v1154
    %v1156 = vpop.f32.mrb[0].mxu0
    %v1157 = vpop.f32.mrb[0].mxu0
    %v1158 = vadd.f32 %v933, %v1157
    %v1159 = vpop.f32.mrb[0].mxu0
    %1160 = vmatprep.mubr.bf16.mxu0 0
    %1161 = vmatmul.mubr.bf16.gmra.mrb[0].mxu0 %v512
    %v1162 = vpop.f32.mrb[0].mxu0
    %v1163 = vadd.f32 %v938, %v1162
    %v1164 = vpop.f32.mrb[0].mxu0
    %v1165 = vpop.f32.mrb[0].mxu0
    %v1166 = vadd.f32 %v941, %v1165
    %v1167 = vpop.f32.mrb[0].mxu0
    %1168 = vmatprep.mubr.bf16.mxu0 0
    %1169 = vmatmul.mubr.bf16.gmra.mrb[0].mxu0 %v515
    %v1170 = vpop.f32.mrb[0].mxu0
    %v1171 = vadd.f32 %v946, %v1170
    %v1172 = vpop.f32.mrb[0].mxu0
    %v1173 = vpop.f32.mrb[0].mxu0
    %v1174 = vadd.f32 %v949, %v1173
    %v1175 = vpop.f32.mrb[0].mxu0
    %1176 = vmatprep.mubr.bf16.mxu0 0
    %1177 = vmatmul.mubr.bf16.gmra.mrb[0].mxu0 %v518
    %v1178 = vpop.f32.mrb[0].mxu0
    %v1179 = vadd.f32 %v954, %v1178
    %v1180 = vpop.f32.mrb[0].mxu0
    %v1181 = vpop.f32.mrb[0].mxu0
    %v1182 = vadd.f32 %v957, %v1181
    %v1183 = vpop.f32.mrb[0].mxu0
    %1184 = vdwg.mxu0
    %v1185 = vpack.c.bf16 %v998, %v995
    %v1186 = vpack.c.bf16 %v1006, %v1003
    %v1187 = vpack.c.bf16 %v1014, %v1011
    %v1188 = vpack.c.bf16 %v1022, %v1019
    %v1189 = vpack.c.bf16 %v1030, %v1027
    %v1190 = vpack.c.bf16 %v1038, %v1035
    %v1191 = vpack.c.bf16 %v1046, %v1043
    %v1192 = vpack.c.bf16 %v1054, %v1051
    %v1193 = vpack.c.bf16 %v1062, %v1059
    %v1194 = vpack.c.bf16 %v1070, %v1067
    %v1195 = vpack.c.bf16 %v1078, %v1075
    %v1196 = vpack.c.bf16 %v1086, %v1083
    %v1197 = vpack.c.bf16 %v1094, %v1091
    %v1198 = vpack.c.bf16 %v1102, %v1099
    %v1199 = vpack.c.bf16 %v1110, %v1107
    %v1200 = vpack.c.bf16 %v1118, %v1115
    %v1201 = vpack.c.bf16 %v1126, %v1123
    %v1202 = vpack.c.bf16 %v1134, %v1131
    %v1203 = vpack.c.bf16 %v1142, %v1139
    %v1204 = vpack.c.bf16 %v1150, %v1147
    %v1205 = vpack.c.bf16 %v1158, %v1155
    %v1206 = vpack.c.bf16 %v1166, %v1163
    %v1207 = vpack.c.bf16 %v1174, %v1171
    %v1208 = vpack.c.bf16 %v1182, %v1179
    %1209 = vmatprep.subr.bf16.mxu0 0
    %1210 = vmatpush1.bf16.msra.mxu0 %v1185
    %1211 = vmatprep.subr.bf16.mxu0 0
    %1212 = vmatpush1.bf16.msra.mxu0 %v1186
    %1213 = vmatprep.subr.bf16.mxu0 0
    %1214 = vmatpush1.bf16.msra.mxu0 %v1187
    %1215 = vmatprep.subr.bf16.mxu0 0
    %1216 = vmatpush1.bf16.msra.mxu0 %v1188
    %1217 = vmatprep.subr.bf16.mxu0 0
    %1218 = vmatpush1.bf16.msra.mxu0 %v1189
    %1219 = vmatprep.subr.bf16.mxu0 0
    %1220 = vmatpush1.bf16.msra.mxu0 %v1190
    %1221 = vmatprep.subr.bf16.mxu0 0
    %1222 = vmatpush1.bf16.msra.mxu0 %v1191
    %1223 = vmatprep.subr.bf16.mxu0 0
    %1224 = vmatpush1.bf16.msra.mxu0 %v1192
    %1225 = vmatprep.subr.bf16.mxu0 0
    %1226 = vmatpush1.bf16.msra.mxu0 %v1193
    %1227 = vmatprep.subr.bf16.mxu0 0
    %1228 = vmatpush1.bf16.msra.mxu0 %v1194
    %1229 = vmatprep.subr.bf16.mxu0 0
    %1230 = vmatpush1.bf16.msra.mxu0 %v1195
    %1231 = vmatprep.subr.bf16.mxu0 0
    %1232 = vmatpush1.bf16.msra.mxu0 %v1196
    %1233 = vmatprep.subr.bf16.mxu0 0
    %1234 = vmatpush1.bf16.msra.mxu0 %v1197
    %1235 = vmatprep.subr.bf16.mxu0 0
    %1236 = vmatpush1.bf16.msra.mxu0 %v1198
    %1237 = vmatprep.subr.bf16.mxu0 0
    %1238 = vmatpush1.bf16.msra.mxu0 %v1199
    %1239 = vmatprep.subr.bf16.mxu0 0
    %1240 = vmatpush1.bf16.msra.mxu0 %v1200
    %1241 = vmatprep.mubr.bf16.mxu0 %v448
    %1242 = vmatmul.mubr.bf16.gmra.mrb[0].mxu0 %v447
    %v1243 = vpop.f32.mrb[0].mxu0
    %v1244 = vadd.f32 0.0, %v1243
    %v1245 = vpop.f32.mrb[0].mxu0
    %v1246 = vpop.f32.mrb[0].mxu0
    %v1247 = vadd.f32 0.0, %v1246
    %v1248 = vpop.f32.mrb[0].mxu0
    %1249 = vmatprep.mubr.bf16.mxu0 %v451
    %1250 = vmatmul.mubr.bf16.gmra.mrb[0].mxu0 %v450
    %v1251 = vpop.f32.mrb[0].mxu0
    %v1252 = vadd.f32 0.0, %v1251
    %v1253 = vpop.f32.mrb[0].mxu0
    %v1254 = vpop.f32.mrb[0].mxu0
    %v1255 = vadd.f32 0.0, %v1254
    %v1256 = vpop.f32.mrb[0].mxu0
    %1257 = vmatprep.mubr.bf16.mxu0 %v454
    %1258 = vmatmul.mubr.bf16.gmra.mrb[0].mxu0 %v453
    %v1259 = vpop.f32.mrb[0].mxu0
    %v1260 = vadd.f32 0.0, %v1259
    %v1261 = vpop.f32.mrb[0].mxu0
    %v1262 = vpop.f32.mrb[0].mxu0
    %v1263 = vadd.f32 0.0, %v1262
    %v1264 = vpop.f32.mrb[0].mxu0
    %1265 = vmatprep.mubr.bf16.mxu0 %v457
    %1266 = vmatmul.mubr.bf16.gmra.mrb[0].mxu0 %v456
    %v1267 = vpop.f32.mrb[0].mxu0
    %v1268 = vadd.f32 0.0, %v1267
    %v1269 = vpop.f32.mrb[0].mxu0
    %v1270 = vpop.f32.mrb[0].mxu0
    %v1271 = vadd.f32 0.0, %v1270
    %v1272 = vpop.f32.mrb[0].mxu0
    %1273 = vmatprep.mubr.bf16.mxu0 %v460
    %1274 = vmatmul.mubr.bf16.gmra.mrb[0].mxu0 %v459
    %v1275 = vpop.f32.mrb[0].mxu0
    %v1276 = vadd.f32 0.0, %v1275
    %v1277 = vpop.f32.mrb[0].mxu0
    %v1278 = vpop.f32.mrb[0].mxu0
    %v1279 = vadd.f32 0.0, %v1278
    %v1280 = vpop.f32.mrb[0].mxu0
    %1281 = vmatprep.mubr.bf16.mxu0 %v463
    %1282 = vmatmul.mubr.bf16.gmra.mrb[0].mxu0 %v462
    %v1283 = vpop.f32.mrb[0].mxu0
    %v1284 = vadd.f32 0.0, %v1283
    %v1285 = vpop.f32.mrb[0].mxu0
    %v1286 = vpop.f32.mrb[0].mxu0
    %v1287 = vadd.f32 0.0, %v1286
    %v1288 = vpop.f32.mrb[0].mxu0
    %1289 = vmatprep.mubr.bf16.mxu0 %v466
    %1290 = vmatmul.mubr.bf16.gmra.mrb[0].mxu0 %v465
    %v1291 = vpop.f32.mrb[0].mxu0
    %v1292 = vadd.f32 0.0, %v1291
    %v1293 = vpop.f32.mrb[0].mxu0
    %v1294 = vpop.f32.mrb[0].mxu0
    %v1295 = vadd.f32 0.0, %v1294
    %v1296 = vpop.f32.mrb[0].mxu0
    %1297 = vmatprep.mubr.bf16.mxu0 %v469
    %1298 = vmatmul.mubr.bf16.gmra.mrb[0].mxu0 %v468
    %v1299 = vpop.f32.mrb[0].mxu0
    %v1300 = vadd.f32 0.0, %v1299
    %v1301 = vpop.f32.mrb[0].mxu0
    %v1302 = vpop.f32.mrb[0].mxu0
    %v1303 = vadd.f32 0.0, %v1302
    %v1304 = vpop.f32.mrb[0].mxu0
    %1305 = vmatprep.mubr.bf16.mxu0 %v472
    %1306 = vmatmul.mubr.bf16.gmra.mrb[0].mxu0 %v471
    %v1307 = vpop.f32.mrb[0].mxu0
    %v1308 = vadd.f32 0.0, %v1307
    %v1309 = vpop.f32.mrb[0].mxu0
    %v1310 = vpop.f32.mrb[0].mxu0
    %v1311 = vadd.f32 0.0, %v1310
    %v1312 = vpop.f32.mrb[0].mxu0
    %1313 = vmatprep.mubr.bf16.mxu0 %v475
    %1314 = vmatmul.mubr.bf16.gmra.mrb[0].mxu0 %v474
    %v1315 = vpop.f32.mrb[0].mxu0
    %v1316 = vadd.f32 0.0, %v1315
    %v1317 = vpop.f32.mrb[0].mxu0
    %v1318 = vpop.f32.mrb[0].mxu0
    %v1319 = vadd.f32 0.0, %v1318
    %v1320 = vpop.f32.mrb[0].mxu0
    %1321 = vmatprep.mubr.bf16.mxu0 %v478
    %1322 = vmatmul.mubr.bf16.gmra.mrb[0].mxu0 %v477
    %v1323 = vpop.f32.mrb[0].mxu0
    %v1324 = vadd.f32 0.0, %v1323
    %v1325 = vpop.f32.mrb[0].mxu0
    %v1326 = vpop.f32.mrb[0].mxu0
    %v1327 = vadd.f32 0.0, %v1326
    %v1328 = vpop.f32.mrb[0].mxu0
    %1329 = vmatprep.mubr.bf16.mxu0 %v481
    %1330 = vmatmul.mubr.bf16.gmra.mrb[0].mxu0 %v480
    %v1331 = vpop.f32.mrb[0].mxu0
    %v1332 = vadd.f32 0.0, %v1331
    %v1333 = vpop.f32.mrb[0].mxu0
    %v1334 = vpop.f32.mrb[0].mxu0
    %v1335 = vadd.f32 0.0, %v1334
    %v1336 = vpop.f32.mrb[0].mxu0
    %1337 = vmatprep.mubr.bf16.mxu0 %v484
    %1338 = vmatmul.mubr.bf16.gmra.mrb[0].mxu0 %v483
    %v1339 = vpop.f32.mrb[0].mxu0
    %v1340 = vadd.f32 0.0, %v1339
    %v1341 = vpop.f32.mrb[0].mxu0
    %v1342 = vpop.f32.mrb[0].mxu0
    %v1343 = vadd.f32 0.0, %v1342
    %v1344 = vpop.f32.mrb[0].mxu0
    %1345 = vmatprep.mubr.bf16.mxu0 %v487
    %1346 = vmatmul.mubr.bf16.gmra.mrb[0].mxu0 %v486
    %v1347 = vpop.f32.mrb[0].mxu0
    %v1348 = vadd.f32 0.0, %v1347
    %v1349 = vpop.f32.mrb[0].mxu0
    %v1350 = vpop.f32.mrb[0].mxu0
    %v1351 = vadd.f32 0.0, %v1350
    %v1352 = vpop.f32.mrb[0].mxu0
    %1353 = vmatprep.mubr.bf16.mxu0 %v490
    %1354 = vmatmul.mubr.bf16.gmra.mrb[0].mxu0 %v489
    %v1355 = vpop.f32.mrb[0].mxu0
    %v1356 = vadd.f32 0.0, %v1355
    %v1357 = vpop.f32.mrb[0].mxu0
    %v1358 = vpop.f32.mrb[0].mxu0
    %v1359 = vadd.f32 0.0, %v1358
    %v1360 = vpop.f32.mrb[0].mxu0
    %1361 = vmatprep.mubr.bf16.mxu0 %v493
    %1362 = vmatmul.mubr.bf16.gmra.mrb[0].mxu0 %v492
    %v1363 = vpop.f32.mrb[0].mxu0
    %v1364 = vadd.f32 0.0, %v1363
    %v1365 = vpop.f32.mrb[0].mxu0
    %v1366 = vpop.f32.mrb[0].mxu0
    %v1367 = vadd.f32 0.0, %v1366
    %v1368 = vpop.f32.mrb[0].mxu0
    %1369 = vmatprep.mubr.bf16.mxu0 %v496
    %1370 = vmatmul.mubr.bf16.gmra.mrb[0].mxu0 %v495
    %v1371 = vpop.f32.mrb[0].mxu0
    %v1372 = vadd.f32 0.0, %v1371
    %v1373 = vpop.f32.mrb[0].mxu0
    %v1374 = vpop.f32.mrb[0].mxu0
    %v1375 = vadd.f32 0.0, %v1374
    %v1376 = vpop.f32.mrb[0].mxu0
    %1377 = vmatprep.mubr.bf16.mxu0 %v499
    %1378 = vmatmul.mubr.bf16.gmra.mrb[0].mxu0 %v498
    %v1379 = vpop.f32.mrb[0].mxu0
    %v1380 = vadd.f32 0.0, %v1379
    %v1381 = vpop.f32.mrb[0].mxu0
    %v1382 = vpop.f32.mrb[0].mxu0
    %v1383 = vadd.f32 0.0, %v1382
    %v1384 = vpop.f32.mrb[0].mxu0
    %1385 = vmatprep.mubr.bf16.mxu0 %v502
    %1386 = vmatmul.mubr.bf16.gmra.mrb[0].mxu0 %v501
    %v1387 = vpop.f32.mrb[0].mxu0
    %v1388 = vadd.f32 0.0, %v1387
    %v1389 = vpop.f32.mrb[0].mxu0
    %v1390 = vpop.f32.mrb[0].mxu0
    %v1391 = vadd.f32 0.0, %v1390
    %v1392 = vpop.f32.mrb[0].mxu0
    %1393 = vmatprep.mubr.bf16.mxu0 %v505
    %1394 = vmatmul.mubr.bf16.gmra.mrb[0].mxu0 %v504
    %v1395 = vpop.f32.mrb[0].mxu0
    %v1396 = vadd.f32 0.0, %v1395
    %v1397 = vpop.f32.mrb[0].mxu0
    %v1398 = vpop.f32.mrb[0].mxu0
    %v1399 = vadd.f32 0.0, %v1398
    %v1400 = vpop.f32.mrb[0].mxu0
    %1401 = vmatprep.mubr.bf16.mxu0 %v508
    %1402 = vmatmul.mubr.bf16.gmra.mrb[0].mxu0 %v507
    %v1403 = vpop.f32.mrb[0].mxu0
    %v1404 = vadd.f32 0.0, %v1403
    %v1405 = vpop.f32.mrb[0].mxu0
    %v1406 = vpop.f32.mrb[0].mxu0
    %v1407 = vadd.f32 0.0, %v1406
    %v1408 = vpop.f32.mrb[0].mxu0
    %1409 = vmatprep.mubr.bf16.mxu0 %v511
    %1410 = vmatmul.mubr.bf16.gmra.mrb[0].mxu0 %v510
    %v1411 = vpop.f32.mrb[0].mxu0
    %v1412 = vadd.f32 0.0, %v1411
    %v1413 = vpop.f32.mrb[0].mxu0
    %v1414 = vpop.f32.mrb[0].mxu0
    %v1415 = vadd.f32 0.0, %v1414
    %v1416 = vpop.f32.mrb[0].mxu0
    %1417 = vmatprep.mubr.bf16.mxu0 %v514
    %1418 = vmatmul.mubr.bf16.gmra.mrb[0].mxu0 %v513
    %v1419 = vpop.f32.mrb[0].mxu0
    %v1420 = vadd.f32 0.0, %v1419
    %v1421 = vpop.f32.mrb[0].mxu0
    %v1422 = vpop.f32.mrb[0].mxu0
    %v1423 = vadd.f32 0.0, %v1422
    %v1424 = vpop.f32.mrb[0].mxu0
    %1425 = vmatprep.mubr.bf16.mxu0 %v517
    %1426 = vmatmul.mubr.bf16.gmra.mrb[0].mxu0 %v516
    %v1427 = vpop.f32.mrb[0].mxu0
    %v1428 = vadd.f32 0.0, %v1427
    %v1429 = vpop.f32.mrb[0].mxu0
    %v1430 = vpop.f32.mrb[0].mxu0
    %v1431 = vadd.f32 0.0, %v1430
    %v1432 = vpop.f32.mrb[0].mxu0
    %1433 = vdwg.mxu0
    %1434 = vmatprep.subr.bf16.mxu0 0
    %1435 = vmatpush1.bf16.msra.mxu0 %v1201
    %1436 = vmatprep.subr.bf16.mxu0 0
    %1437 = vmatpush1.bf16.msra.mxu0 %v1202
    %1438 = vmatprep.subr.bf16.mxu0 0
    %1439 = vmatpush1.bf16.msra.mxu0 %v1203
    %1440 = vmatprep.subr.bf16.mxu0 0
    %1441 = vmatpush1.bf16.msra.mxu0 %v1204
    %1442 = vmatprep.subr.bf16.mxu0 0
    %1443 = vmatpush1.bf16.msra.mxu0 %v1205
    %1444 = vmatprep.subr.bf16.mxu0 0
    %1445 = vmatpush1.bf16.msra.mxu0 %v1206
    %1446 = vmatprep.subr.bf16.mxu0 0
    %1447 = vmatpush1.bf16.msra.mxu0 %v1207
    %1448 = vmatprep.subr.bf16.mxu0 0
    %1449 = vmatpush1.bf16.msra.mxu0 %v1208
    %1450 = vmatprep.subr.bf16.mxu0 0
    %1451 = vmatpush1.bf16.msra.mxu0 0
    %1452 = vmatprep.subr.bf16.mxu0 0
    %1453 = vmatpush1.bf16.msra.mxu0 0
    %1454 = vmatprep.subr.bf16.mxu0 0
    %1455 = vmatpush1.bf16.msra.mxu0 0
    %1456 = vmatprep.subr.bf16.mxu0 0
    %1457 = vmatpush1.bf16.msra.mxu0 0
    %1458 = vmatprep.subr.bf16.mxu0 0
    %1459 = vmatpush1.bf16.msra.mxu0 0
    %1460 = vmatprep.subr.bf16.mxu0 0
    %1461 = vmatpush1.bf16.msra.mxu0 0
    %1462 = vmatprep.subr.bf16.mxu0 0
    %1463 = vmatpush1.bf16.msra.mxu0 0
    %1464 = vmatprep.subr.bf16.mxu0 0
    %1465 = vmatpush1.bf16.msra.mxu0 0
    %1466 = vmatprep.mubr.bf16.mxu0 0
    %1467 = vmatmul.mubr.bf16.gmra.mrb[0].mxu0 %v449
    %v1468 = vpop.f32.mrb[0].mxu0
    %v1469 = vadd.f32 %v1244, %v1468
    %v1470 = vpop.f32.mrb[0].mxu0
    %v1471 = vpop.f32.mrb[0].mxu0
    %v1472 = vadd.f32 %v1247, %v1471
    %v1473 = vpop.f32.mrb[0].mxu0
    %1474 = vmatprep.mubr.bf16.mxu0 0
    %1475 = vmatmul.mubr.bf16.gmra.mrb[0].mxu0 %v452
    %v1476 = vpop.f32.mrb[0].mxu0
    %v1477 = vadd.f32 %v1252, %v1476
    %v1478 = vpop.f32.mrb[0].mxu0
    %v1479 = vpop.f32.mrb[0].mxu0
    %v1480 = vadd.f32 %v1255, %v1479
    %v1481 = vpop.f32.mrb[0].mxu0
    %1482 = vmatprep.mubr.bf16.mxu0 0
    %1483 = vmatmul.mubr.bf16.gmra.mrb[0].mxu0 %v455
    %v1484 = vpop.f32.mrb[0].mxu0
    %v1485 = vadd.f32 %v1260, %v1484
    %v1486 = vpop.f32.mrb[0].mxu0
    %v1487 = vpop.f32.mrb[0].mxu0
    %v1488 = vadd.f32 %v1263, %v1487
    %v1489 = vpop.f32.mrb[0].mxu0
    %1490 = vmatprep.mubr.bf16.mxu0 0
    %1491 = vmatmul.mubr.bf16.gmra.mrb[0].mxu0 %v458
    %v1492 = vpop.f32.mrb[0].mxu0
    %v1493 = vadd.f32 %v1268, %v1492
    %v1494 = vpop.f32.mrb[0].mxu0
    %v1495 = vpop.f32.mrb[0].mxu0
    %v1496 = vadd.f32 %v1271, %v1495
    %v1497 = vpop.f32.mrb[0].mxu0
    %1498 = vmatprep.mubr.bf16.mxu0 0
    %1499 = vmatmul.mubr.bf16.gmra.mrb[0].mxu0 %v461
    %v1500 = vpop.f32.mrb[0].mxu0
    %v1501 = vadd.f32 %v1276, %v1500
    %v1502 = vpop.f32.mrb[0].mxu0
    %v1503 = vpop.f32.mrb[0].mxu0
    %v1504 = vadd.f32 %v1279, %v1503
    %v1505 = vpop.f32.mrb[0].mxu0
    %1506 = vmatprep.mubr.bf16.mxu0 0
    %1507 = vmatmul.mubr.bf16.gmra.mrb[0].mxu0 %v464
    %v1508 = vpop.f32.mrb[0].mxu0
    %v1509 = vadd.f32 %v1284, %v1508
    %v1510 = vpop.f32.mrb[0].mxu0
    %v1511 = vpop.f32.mrb[0].mxu0
    %v1512 = vadd.f32 %v1287, %v1511
    %v1513 = vpop.f32.mrb[0].mxu0
    %1514 = vmatprep.mubr.bf16.mxu0 0
    %1515 = vmatmul.mubr.bf16.gmra.mrb[0].mxu0 %v467
    %v1516 = vpop.f32.mrb[0].mxu0
    %v1517 = vadd.f32 %v1292, %v1516
    %v1518 = vpop.f32.mrb[0].mxu0
    %v1519 = vpop.f32.mrb[0].mxu0
    %v1520 = vadd.f32 %v1295, %v1519
    %v1521 = vpop.f32.mrb[0].mxu0
    %1522 = vmatprep.mubr.bf16.mxu0 0
    %1523 = vmatmul.mubr.bf16.gmra.mrb[0].mxu0 %v470
    %v1524 = vpop.f32.mrb[0].mxu0
    %v1525 = vadd.f32 %v1300, %v1524
    %v1526 = vpop.f32.mrb[0].mxu0
    %v1527 = vpop.f32.mrb[0].mxu0
    %v1528 = vadd.f32 %v1303, %v1527
    %v1529 = vpop.f32.mrb[0].mxu0
    %1530 = vmatprep.mubr.bf16.mxu0 0
    %1531 = vmatmul.mubr.bf16.gmra.mrb[0].mxu0 %v473
    %v1532 = vpop.f32.mrb[0].mxu0
    %v1533 = vadd.f32 %v1308, %v1532
    %v1534 = vpop.f32.mrb[0].mxu0
    %v1535 = vpop.f32.mrb[0].mxu0
    %v1536 = vadd.f32 %v1311, %v1535
    %v1537 = vpop.f32.mrb[0].mxu0
    %1538 = vmatprep.mubr.bf16.mxu0 0
    %1539 = vmatmul.mubr.bf16.gmra.mrb[0].mxu0 %v476
    %v1540 = vpop.f32.mrb[0].mxu0
    %v1541 = vadd.f32 %v1316, %v1540
    %v1542 = vpop.f32.mrb[0].mxu0
    %v1543 = vpop.f32.mrb[0].mxu0
    %v1544 = vadd.f32 %v1319, %v1543
    %v1545 = vpop.f32.mrb[0].mxu0
    %1546 = vmatprep.mubr.bf16.mxu0 0
    %1547 = vmatmul.mubr.bf16.gmra.mrb[0].mxu0 %v479
    %v1548 = vpop.f32.mrb[0].mxu0
    %v1549 = vadd.f32 %v1324, %v1548
    %v1550 = vpop.f32.mrb[0].mxu0
    %v1551 = vpop.f32.mrb[0].mxu0
    %v1552 = vadd.f32 %v1327, %v1551
    %v1553 = vpop.f32.mrb[0].mxu0
    %1554 = vmatprep.mubr.bf16.mxu0 0
    %1555 = vmatmul.mubr.bf16.gmra.mrb[0].mxu0 %v482
    %v1556 = vpop.f32.mrb[0].mxu0
    %v1557 = vadd.f32 %v1332, %v1556
    %v1558 = vpop.f32.mrb[0].mxu0
    %v1559 = vpop.f32.mrb[0].mxu0
    %v1560 = vadd.f32 %v1335, %v1559
    %v1561 = vpop.f32.mrb[0].mxu0
    %1562 = vmatprep.mubr.bf16.mxu0 0
    %1563 = vmatmul.mubr.bf16.gmra.mrb[0].mxu0 %v485
    %v1564 = vpop.f32.mrb[0].mxu0
    %v1565 = vadd.f32 %v1340, %v1564
    %v1566 = vpop.f32.mrb[0].mxu0
    %v1567 = vpop.f32.mrb[0].mxu0
    %v1568 = vadd.f32 %v1343, %v1567
    %v1569 = vpop.f32.mrb[0].mxu0
    %1570 = vmatprep.mubr.bf16.mxu0 0
    %1571 = vmatmul.mubr.bf16.gmra.mrb[0].mxu0 %v488
    %v1572 = vpop.f32.mrb[0].mxu0
    %v1573 = vadd.f32 %v1348, %v1572
    %v1574 = vpop.f32.mrb[0].mxu0
    %v1575 = vpop.f32.mrb[0].mxu0
    %v1576 = vadd.f32 %v1351, %v1575
    %v1577 = vpop.f32.mrb[0].mxu0
    %1578 = vmatprep.mubr.bf16.mxu0 0
    %1579 = vmatmul.mubr.bf16.gmra.mrb[0].mxu0 %v491
    %v1580 = vpop.f32.mrb[0].mxu0
    %v1581 = vadd.f32 %v1356, %v1580
    %v1582 = vpop.f32.mrb[0].mxu0
    %v1583 = vpop.f32.mrb[0].mxu0
    %v1584 = vadd.f32 %v1359, %v1583
    %v1585 = vpop.f32.mrb[0].mxu0
    %1586 = vmatprep.mubr.bf16.mxu0 0
    %1587 = vmatmul.mubr.bf16.gmra.mrb[0].mxu0 %v494
    %v1588 = vpop.f32.mrb[0].mxu0
    %v1589 = vadd.f32 %v1364, %v1588
    %v1590 = vpop.f32.mrb[0].mxu0
    %v1591 = vpop.f32.mrb[0].mxu0
    %v1592 = vadd.f32 %v1367, %v1591
    %v1593 = vpop.f32.mrb[0].mxu0
    %1594 = vmatprep.mubr.bf16.mxu0 0
    %1595 = vmatmul.mubr.bf16.gmra.mrb[0].mxu0 %v497
    %v1596 = vpop.f32.mrb[0].mxu0
    %v1597 = vadd.f32 %v1372, %v1596
    %v1598 = vpop.f32.mrb[0].mxu0
    %v1599 = vpop.f32.mrb[0].mxu0
    %v1600 = vadd.f32 %v1375, %v1599
    %v1601 = vpop.f32.mrb[0].mxu0
    %1602 = vmatprep.mubr.bf16.mxu0 0
    %1603 = vmatmul.mubr.bf16.gmra.mrb[0].mxu0 %v500
    %v1604 = vpop.f32.mrb[0].mxu0
    %v1605 = vadd.f32 %v1380, %v1604
    %v1606 = vpop.f32.mrb[0].mxu0
    %v1607 = vpop.f32.mrb[0].mxu0
    %v1608 = vadd.f32 %v1383, %v1607
    %v1609 = vpop.f32.mrb[0].mxu0
    %1610 = vmatprep.mubr.bf16.mxu0 0
    %1611 = vmatmul.mubr.bf16.gmra.mrb[0].mxu0 %v503
    %v1612 = vpop.f32.mrb[0].mxu0
    %v1613 = vadd.f32 %v1388, %v1612
    %v1614 = vpop.f32.mrb[0].mxu0
    %v1615 = vpop.f32.mrb[0].mxu0
    %v1616 = vadd.f32 %v1391, %v1615
    %v1617 = vpop.f32.mrb[0].mxu0
    %1618 = vmatprep.mubr.bf16.mxu0 0
    %1619 = vmatmul.mubr.bf16.gmra.mrb[0].mxu0 %v506
    %v1620 = vpop.f32.mrb[0].mxu0
    %v1621 = vadd.f32 %v1396, %v1620
    %v1622 = vpop.f32.mrb[0].mxu0
    %v1623 = vpop.f32.mrb[0].mxu0
    %v1624 = vadd.f32 %v1399, %v1623
    %v1625 = vpop.f32.mrb[0].mxu0
    %1626 = vmatprep.mubr.bf16.mxu0 0
    %1627 = vmatmul.mubr.bf16.gmra.mrb[0].mxu0 %v509
    %v1628 = vpop.f32.mrb[0].mxu0
    %v1629 = vadd.f32 %v1404, %v1628
    %v1630 = vpop.f32.mrb[0].mxu0
    %v1631 = vpop.f32.mrb[0].mxu0
    %v1632 = vadd.f32 %v1407, %v1631
    %v1633 = vpop.f32.mrb[0].mxu0
    %1634 = vmatprep.mubr.bf16.mxu0 0
    %1635 = vmatmul.mubr.bf16.gmra.mrb[0].mxu0 %v512
    %v1636 = vpop.f32.mrb[0].mxu0
    %v1637 = vadd.f32 %v1412, %v1636
    %v1638 = vpop.f32.mrb[0].mxu0
    %v1639 = vpop.f32.mrb[0].mxu0
    %v1640 = vadd.f32 %v1415, %v1639
    %v1641 = vpop.f32.mrb[0].mxu0
    %1642 = vmatprep.mubr.bf16.mxu0 0
    %1643 = vmatmul.mubr.bf16.gmra.mrb[0].mxu0 %v515
    %v1644 = vpop.f32.mrb[0].mxu0
    %v1645 = vadd.f32 %v1420, %v1644
    %v1646 = vpop.f32.mrb[0].mxu0
    %v1647 = vpop.f32.mrb[0].mxu0
    %v1648 = vadd.f32 %v1423, %v1647
    %v1649 = vpop.f32.mrb[0].mxu0
    %1650 = vmatprep.mubr.bf16.mxu0 0
    %1651 = vmatmul.mubr.bf16.gmra.mrb[0].mxu0 %v518
    %v1652 = vpop.f32.mrb[0].mxu0
    %v1653 = vadd.f32 %v1428, %v1652
    %v1654 = vpop.f32.mrb[0].mxu0
    %v1655 = vpop.f32.mrb[0].mxu0
    %v1656 = vadd.f32 %v1431, %v1655
    %v1657 = vpop.f32.mrb[0].mxu0
    %1658 = vdwg.mxu0
    %1659 = vadd.xlane.f32.xlu0 %v1469
    %v1660 = vpop.xlane.xlu0 %1659
    %1661 = vadd.xlane.f32.xlu0 %v1472
    %v1662 = vpop.xlane.xlu0 %1661
    %1663 = vadd.xlane.f32.xlu0 %v1477
    %v1664 = vpop.xlane.xlu0 %1663
    %1665 = vadd.xlane.f32.xlu0 %v1480
    %v1666 = vpop.xlane.xlu0 %1665
    %1667 = vadd.xlane.f32.xlu0 %v1485
    %v1668 = vpop.xlane.xlu0 %1667
    %1669 = vadd.xlane.f32.xlu0 %v1488
    %v1670 = vpop.xlane.xlu0 %1669
    %1671 = vadd.xlane.f32.xlu0 %v1493
    %v1672 = vpop.xlane.xlu0 %1671
    %1673 = vadd.xlane.f32.xlu0 %v1496
    %v1674 = vpop.xlane.xlu0 %1673
    %1675 = vadd.xlane.f32.xlu0 %v1501
    %v1676 = vpop.xlane.xlu0 %1675
    %1677 = vadd.xlane.f32.xlu0 %v1504
    %v1678 = vpop.xlane.xlu0 %1677
    %1679 = vadd.xlane.f32.xlu0 %v1509
    %v1680 = vpop.xlane.xlu0 %1679
    %1681 = vadd.xlane.f32.xlu0 %v1512
    %v1682 = vpop.xlane.xlu0 %1681
    %1683 = vadd.xlane.f32.xlu0 %v1517
    %v1684 = vpop.xlane.xlu0 %1683
    %1685 = vadd.xlane.f32.xlu0 %v1520
    %v1686 = vpop.xlane.xlu0 %1685
    %1687 = vadd.xlane.f32.xlu0 %v1525
    %v1688 = vpop.xlane.xlu0 %1687
    %1689 = vadd.xlane.f32.xlu0 %v1528
    %v1690 = vpop.xlane.xlu0 %1689
    %1691 = vadd.xlane.f32.xlu0 %v1533
    %v1692 = vpop.xlane.xlu0 %1691
    %1693 = vadd.xlane.f32.xlu0 %v1536
    %v1694 = vpop.xlane.xlu0 %1693
    %1695 = vadd.xlane.f32.xlu0 %v1541
    %v1696 = vpop.xlane.xlu0 %1695
    %1697 = vadd.xlane.f32.xlu0 %v1544
    %v1698 = vpop.xlane.xlu0 %1697
    %1699 = vadd.xlane.f32.xlu0 %v1549
    %v1700 = vpop.xlane.xlu0 %1699
    %1701 = vadd.xlane.f32.xlu0 %v1552
    %v1702 = vpop.xlane.xlu0 %1701
    %1703 = vadd.xlane.f32.xlu0 %v1557
    %v1704 = vpop.xlane.xlu0 %1703
    %1705 = vadd.xlane.f32.xlu0 %v1560
    %v1706 = vpop.xlane.xlu0 %1705
    %1707 = vadd.xlane.f32.xlu0 %v1565
    %v1708 = vpop.xlane.xlu0 %1707
    %1709 = vadd.xlane.f32.xlu0 %v1568
    %v1710 = vpop.xlane.xlu0 %1709
    %1711 = vadd.xlane.f32.xlu0 %v1573
    %v1712 = vpop.xlane.xlu0 %1711
    %1713 = vadd.xlane.f32.xlu0 %v1576
    %v1714 = vpop.xlane.xlu0 %1713
    %1715 = vadd.xlane.f32.xlu0 %v1581
    %v1716 = vpop.xlane.xlu0 %1715
    %1717 = vadd.xlane.f32.xlu0 %v1584
    %v1718 = vpop.xlane.xlu0 %1717
    %1719 = vadd.xlane.f32.xlu0 %v1589
    %v1720 = vpop.xlane.xlu0 %1719
    %1721 = vadd.xlane.f32.xlu0 %v1592
    %v1722 = vpop.xlane.xlu0 %1721
    %1723 = vadd.xlane.f32.xlu0 %v1597
    %v1724 = vpop.xlane.xlu0 %1723
    %1725 = vadd.xlane.f32.xlu0 %v1600
    %v1726 = vpop.xlane.xlu0 %1725
    %1727 = vadd.xlane.f32.xlu0 %v1605
    %v1728 = vpop.xlane.xlu0 %1727
    %1729 = vadd.xlane.f32.xlu0 %v1608
    %v1730 = vpop.xlane.xlu0 %1729
    %1731 = vadd.xlane.f32.xlu0 %v1613
    %v1732 = vpop.xlane.xlu0 %1731
    %1733 = vadd.xlane.f32.xlu0 %v1616
    %v1734 = vpop.xlane.xlu0 %1733
    %1735 = vadd.xlane.f32.xlu0 %v1621
    %v1736 = vpop.xlane.xlu0 %1735
    %1737 = vadd.xlane.f32.xlu0 %v1624
    %v1738 = vpop.xlane.xlu0 %1737
    %1739 = vadd.xlane.f32.xlu0 %v1629
    %v1740 = vpop.xlane.xlu0 %1739
    %1741 = vadd.xlane.f32.xlu0 %v1632
    %v1742 = vpop.xlane.xlu0 %1741
    %1743 = vadd.xlane.f32.xlu0 %v1637
    %v1744 = vpop.xlane.xlu0 %1743
    %1745 = vadd.xlane.f32.xlu0 %v1640
    %v1746 = vpop.xlane.xlu0 %1745
    %1747 = vadd.xlane.f32.xlu0 %v1645
    %v1748 = vpop.xlane.xlu0 %1747
    %1749 = vadd.xlane.f32.xlu0 %v1648
    %v1750 = vpop.xlane.xlu0 %1749
    %1751 = vadd.xlane.f32.xlu0 %v1653
    %v1752 = vpop.xlane.xlu0 %1751
    %1753 = vadd.xlane.f32.xlu0 %v1656
    %v1754 = vpop.xlane.xlu0 %1753
    %v1755 = vrcp.pop 128.0
    %v1756 = vmul.f32 %v1660, %v1755
    %v1757 = vmul.f32 %v1662, %v1755
    %v1758 = vmul.f32 %v1664, %v1755
    %v1759 = vmul.f32 %v1666, %v1755
    %v1760 = vmul.f32 %v1668, %v1755
    %v1761 = vmul.f32 %v1670, %v1755
    %v1762 = vmul.f32 %v1672, %v1755
    %v1763 = vmul.f32 %v1674, %v1755
    %v1764 = vmul.f32 %v1676, %v1755
    %v1765 = vmul.f32 %v1678, %v1755
    %v1766 = vmul.f32 %v1680, %v1755
    %v1767 = vmul.f32 %v1682, %v1755
    %v1768 = vmul.f32 %v1684, %v1755
    %v1769 = vmul.f32 %v1686, %v1755
    %v1770 = vmul.f32 %v1688, %v1755
    %v1771 = vmul.f32 %v1690, %v1755
    %v1772 = vmul.f32 %v1692, %v1755
    %v1773 = vmul.f32 %v1694, %v1755
    %v1774 = vmul.f32 %v1696, %v1755
    %v1775 = vmul.f32 %v1698, %v1755
    %v1776 = vmul.f32 %v1700, %v1755
    %v1777 = vmul.f32 %v1702, %v1755
    %v1778 = vmul.f32 %v1704, %v1755
    %v1779 = vmul.f32 %v1706, %v1755
    %v1780 = vmul.f32 %v1708, %v1755
    %v1781 = vmul.f32 %v1710, %v1755
    %v1782 = vmul.f32 %v1712, %v1755
    %v1783 = vmul.f32 %v1714, %v1755
    %v1784 = vmul.f32 %v1716, %v1755
    %v1785 = vmul.f32 %v1718, %v1755
    %v1786 = vmul.f32 %v1720, %v1755
    %v1787 = vmul.f32 %v1722, %v1755
    %v1788 = vmul.f32 %v1724, %v1755
    %v1789 = vmul.f32 %v1726, %v1755
    %v1790 = vmul.f32 %v1728, %v1755
    %v1791 = vmul.f32 %v1730, %v1755
    %v1792 = vmul.f32 %v1732, %v1755
    %v1793 = vmul.f32 %v1734, %v1755
    %v1794 = vmul.f32 %v1736, %v1755
    %v1795 = vmul.f32 %v1738, %v1755
    %v1796 = vmul.f32 %v1740, %v1755
    %v1797 = vmul.f32 %v1742, %v1755
    %v1798 = vmul.f32 %v1744, %v1755
    %v1799 = vmul.f32 %v1746, %v1755
    %v1800 = vmul.f32 %v1748, %v1755
    %v1801 = vmul.f32 %v1750, %v1755
    %v1802 = vmul.f32 %v1752, %v1755
    %v1803 = vmul.f32 %v1754, %v1755
    %v1804 = vsub.f32 %v1469, %v1756
    %v1805 = vsub.f32 %v1472, %v1757
    %v1806 = vsub.f32 %v1477, %v1758
    %v1807 = vsub.f32 %v1480, %v1759
    %v1808 = vsub.f32 %v1485, %v1760
    %v1809 = vsub.f32 %v1488, %v1761
    %v1810 = vsub.f32 %v1493, %v1762
    %v1811 = vsub.f32 %v1496, %v1763
    %v1812 = vsub.f32 %v1501, %v1764
    %v1813 = vsub.f32 %v1504, %v1765
    %v1814 = vsub.f32 %v1509, %v1766
    %v1815 = vsub.f32 %v1512, %v1767
    %v1816 = vsub.f32 %v1517, %v1768
    %v1817 = vsub.f32 %v1520, %v1769
    %v1818 = vsub.f32 %v1525, %v1770
    %v1819 = vsub.f32 %v1528, %v1771
    %v1820 = vsub.f32 %v1533, %v1772
    %v1821 = vsub.f32 %v1536, %v1773
    %v1822 = vsub.f32 %v1541, %v1774
    %v1823 = vsub.f32 %v1544, %v1775
    %v1824 = vsub.f32 %v1549, %v1776
    %v1825 = vsub.f32 %v1552, %v1777
    %v1826 = vsub.f32 %v1557, %v1778
    %v1827 = vsub.f32 %v1560, %v1779
    %v1828 = vsub.f32 %v1565, %v1780
    %v1829 = vsub.f32 %v1568, %v1781
    %v1830 = vsub.f32 %v1573, %v1782
    %v1831 = vsub.f32 %v1576, %v1783
    %v1832 = vsub.f32 %v1581, %v1784
    %v1833 = vsub.f32 %v1584, %v1785
    %v1834 = vsub.f32 %v1589, %v1786
    %v1835 = vsub.f32 %v1592, %v1787
    %v1836 = vsub.f32 %v1597, %v1788
    %v1837 = vsub.f32 %v1600, %v1789
    %v1838 = vsub.f32 %v1605, %v1790
    %v1839 = vsub.f32 %v1608, %v1791
    %v1840 = vsub.f32 %v1613, %v1792
    %v1841 = vsub.f32 %v1616, %v1793
    %v1842 = vsub.f32 %v1621, %v1794
    %v1843 = vsub.f32 %v1624, %v1795
    %v1844 = vsub.f32 %v1629, %v1796
    %v1845 = vsub.f32 %v1632, %v1797
    %v1846 = vsub.f32 %v1637, %v1798
    %v1847 = vsub.f32 %v1640, %v1799
    %v1848 = vsub.f32 %v1645, %v1800
    %v1849 = vsub.f32 %v1648, %v1801
    %v1850 = vsub.f32 %v1653, %v1802
    %v1851 = vsub.f32 %v1656, %v1803
    %v1852 = vmul.f32 %v1804, %v1804
    %v1853 = vmul.f32 %v1805, %v1805
    %v1854 = vmul.f32 %v1806, %v1806
    %v1855 = vmul.f32 %v1807, %v1807
    %v1856 = vmul.f32 %v1808, %v1808
    %v1857 = vmul.f32 %v1809, %v1809
    %v1858 = vmul.f32 %v1810, %v1810
    %v1859 = vmul.f32 %v1811, %v1811
    %v1860 = vmul.f32 %v1812, %v1812
    %v1861 = vmul.f32 %v1813, %v1813
    %v1862 = vmul.f32 %v1814, %v1814
    %v1863 = vmul.f32 %v1815, %v1815
    %v1864 = vmul.f32 %v1816, %v1816
    %v1865 = vmul.f32 %v1817, %v1817
    %v1866 = vmul.f32 %v1818, %v1818
    %v1867 = vmul.f32 %v1819, %v1819
    %v1868 = vmul.f32 %v1820, %v1820
    %v1869 = vmul.f32 %v1821, %v1821
    %v1870 = vmul.f32 %v1822, %v1822
    %v1871 = vmul.f32 %v1823, %v1823
    %v1872 = vmul.f32 %v1824, %v1824
    %v1873 = vmul.f32 %v1825, %v1825
    %v1874 = vmul.f32 %v1826, %v1826
    %v1875 = vmul.f32 %v1827, %v1827
    %v1876 = vmul.f32 %v1828, %v1828
    %v1877 = vmul.f32 %v1829, %v1829
    %v1878 = vmul.f32 %v1830, %v1830
    %v1879 = vmul.f32 %v1831, %v1831
    %v1880 = vmul.f32 %v1832, %v1832
    %v1881 = vmul.f32 %v1833, %v1833
    %v1882 = vmul.f32 %v1834, %v1834
    %v1883 = vmul.f32 %v1835, %v1835
    %v1884 = vmul.f32 %v1836, %v1836
    %v1885 = vmul.f32 %v1837, %v1837
    %v1886 = vmul.f32 %v1838, %v1838
    %v1887 = vmul.f32 %v1839, %v1839
    %v1888 = vmul.f32 %v1840, %v1840
    %v1889 = vmul.f32 %v1841, %v1841
    %v1890 = vmul.f32 %v1842, %v1842
    %v1891 = vmul.f32 %v1843, %v1843
    %v1892 = vmul.f32 %v1844, %v1844
    %v1893 = vmul.f32 %v1845, %v1845
    %v1894 = vmul.f32 %v1846, %v1846
    %v1895 = vmul.f32 %v1847, %v1847
    %v1896 = vmul.f32 %v1848, %v1848
    %v1897 = vmul.f32 %v1849, %v1849
    %v1898 = vmul.f32 %v1850, %v1850
    %v1899 = vmul.f32 %v1851, %v1851
    %1900 = vadd.xlane.f32.xlu0 %v1852
    %v1901 = vpop.xlane.xlu0 %1900
    %1902 = vadd.xlane.f32.xlu0 %v1853
    %v1903 = vpop.xlane.xlu0 %1902
    %1904 = vadd.xlane.f32.xlu0 %v1854
    %v1905 = vpop.xlane.xlu0 %1904
    %1906 = vadd.xlane.f32.xlu0 %v1855
    %v1907 = vpop.xlane.xlu0 %1906
    %1908 = vadd.xlane.f32.xlu0 %v1856
    %v1909 = vpop.xlane.xlu0 %1908
    %1910 = vadd.xlane.f32.xlu0 %v1857
    %v1911 = vpop.xlane.xlu0 %1910
    %1912 = vadd.xlane.f32.xlu0 %v1858
    %v1913 = vpop.xlane.xlu0 %1912
    %1914 = vadd.xlane.f32.xlu0 %v1859
    %v1915 = vpop.xlane.xlu0 %1914
    %1916 = vadd.xlane.f32.xlu0 %v1860
    %v1917 = vpop.xlane.xlu0 %1916
    %1918 = vadd.xlane.f32.xlu0 %v1861
    %v1919 = vpop.xlane.xlu0 %1918
    %1920 = vadd.xlane.f32.xlu0 %v1862
    %v1921 = vpop.xlane.xlu0 %1920
    %1922 = vadd.xlane.f32.xlu0 %v1863
    %v1923 = vpop.xlane.xlu0 %1922
    %1924 = vadd.xlane.f32.xlu0 %v1864
    %v1925 = vpop.xlane.xlu0 %1924
    %1926 = vadd.xlane.f32.xlu0 %v1865
    %v1927 = vpop.xlane.xlu0 %1926
    %1928 = vadd.xlane.f32.xlu0 %v1866
    %v1929 = vpop.xlane.xlu0 %1928
    %1930 = vadd.xlane.f32.xlu0 %v1867
    %v1931 = vpop.xlane.xlu0 %1930
    %1932 = vadd.xlane.f32.xlu0 %v1868
    %v1933 = vpop.xlane.xlu0 %1932
    %1934 = vadd.xlane.f32.xlu0 %v1869
    %v1935 = vpop.xlane.xlu0 %1934
    %1936 = vadd.xlane.f32.xlu0 %v1870
    %v1937 = vpop.xlane.xlu0 %1936
    %1938 = vadd.xlane.f32.xlu0 %v1871
    %v1939 = vpop.xlane.xlu0 %1938
    %1940 = vadd.xlane.f32.xlu0 %v1872
    %v1941 = vpop.xlane.xlu0 %1940
    %1942 = vadd.xlane.f32.xlu0 %v1873
    %v1943 = vpop.xlane.xlu0 %1942
    %1944 = vadd.xlane.f32.xlu0 %v1874
    %v1945 = vpop.xlane.xlu0 %1944
    %1946 = vadd.xlane.f32.xlu0 %v1875
    %v1947 = vpop.xlane.xlu0 %1946
    %1948 = vadd.xlane.f32.xlu0 %v1876
    %v1949 = vpop.xlane.xlu0 %1948
    %1950 = vadd.xlane.f32.xlu0 %v1877
    %v1951 = vpop.xlane.xlu0 %1950
    %1952 = vadd.xlane.f32.xlu0 %v1878
    %v1953 = vpop.xlane.xlu0 %1952
    %1954 = vadd.xlane.f32.xlu0 %v1879
    %v1955 = vpop.xlane.xlu0 %1954
    %1956 = vadd.xlane.f32.xlu0 %v1880
    %v1957 = vpop.xlane.xlu0 %1956
    %1958 = vadd.xlane.f32.xlu0 %v1881
    %v1959 = vpop.xlane.xlu0 %1958
    %1960 = vadd.xlane.f32.xlu0 %v1882
    %v1961 = vpop.xlane.xlu0 %1960
    %1962 = vadd.xlane.f32.xlu0 %v1883
    %v1963 = vpop.xlane.xlu0 %1962
    %1964 = vadd.xlane.f32.xlu0 %v1884
    %v1965 = vpop.xlane.xlu0 %1964
    %1966 = vadd.xlane.f32.xlu0 %v1885
    %v1967 = vpop.xlane.xlu0 %1966
    %1968 = vadd.xlane.f32.xlu0 %v1886
    %v1969 = vpop.xlane.xlu0 %1968
    %1970 = vadd.xlane.f32.xlu0 %v1887
    %v1971 = vpop.xlane.xlu0 %1970
    %1972 = vadd.xlane.f32.xlu0 %v1888
    %v1973 = vpop.xlane.xlu0 %1972
    %1974 = vadd.xlane.f32.xlu0 %v1889
    %v1975 = vpop.xlane.xlu0 %1974
    %1976 = vadd.xlane.f32.xlu0 %v1890
    %v1977 = vpop.xlane.xlu0 %1976
    %1978 = vadd.xlane.f32.xlu0 %v1891
    %v1979 = vpop.xlane.xlu0 %1978
    %1980 = vadd.xlane.f32.xlu0 %v1892
    %v1981 = vpop.xlane.xlu0 %1980
    %1982 = vadd.xlane.f32.xlu0 %v1893
    %v1983 = vpop.xlane.xlu0 %1982
    %1984 = vadd.xlane.f32.xlu0 %v1894
    %v1985 = vpop.xlane.xlu0 %1984
    %1986 = vadd.xlane.f32.xlu0 %v1895
    %v1987 = vpop.xlane.xlu0 %1986
    %1988 = vadd.xlane.f32.xlu0 %v1896
    %v1989 = vpop.xlane.xlu0 %1988
    %1990 = vadd.xlane.f32.xlu0 %v1897
    %v1991 = vpop.xlane.xlu0 %1990
    %1992 = vadd.xlane.f32.xlu0 %v1898
    %v1993 = vpop.xlane.xlu0 %1992
    %1994 = vadd.xlane.f32.xlu0 %v1899
    %v1995 = vpop.xlane.xlu0 %1994
    %v1996 = vmul.f32 %v1901, %v1755
    %v1997 = vmul.f32 %v1903, %v1755
    %v1998 = vmul.f32 %v1905, %v1755
    %v1999 = vmul.f32 %v1907, %v1755
    %v2000 = vmul.f32 %v1909, %v1755
    %v2001 = vmul.f32 %v1911, %v1755
    %v2002 = vmul.f32 %v1913, %v1755
    %v2003 = vmul.f32 %v1915, %v1755
    %v2004 = vmul.f32 %v1917, %v1755
    %v2005 = vmul.f32 %v1919, %v1755
    %v2006 = vmul.f32 %v1921, %v1755
    %v2007 = vmul.f32 %v1923, %v1755
    %v2008 = vmul.f32 %v1925, %v1755
    %v2009 = vmul.f32 %v1927, %v1755
    %v2010 = vmul.f32 %v1929, %v1755
    %v2011 = vmul.f32 %v1931, %v1755
    %v2012 = vmul.f32 %v1933, %v1755
    %v2013 = vmul.f32 %v1935, %v1755
    %v2014 = vmul.f32 %v1937, %v1755
    %v2015 = vmul.f32 %v1939, %v1755
    %v2016 = vmul.f32 %v1941, %v1755
    %v2017 = vmul.f32 %v1943, %v1755
    %v2018 = vmul.f32 %v1945, %v1755
    %v2019 = vmul.f32 %v1947, %v1755
    %v2020 = vmul.f32 %v1949, %v1755
    %v2021 = vmul.f32 %v1951, %v1755
    %v2022 = vmul.f32 %v1953, %v1755
    %v2023 = vmul.f32 %v1955, %v1755
    %v2024 = vmul.f32 %v1957, %v1755
    %v2025 = vmul.f32 %v1959, %v1755
    %v2026 = vmul.f32 %v1961, %v1755
    %v2027 = vmul.f32 %v1963, %v1755
    %v2028 = vmul.f32 %v1965, %v1755
    %v2029 = vmul.f32 %v1967, %v1755
    %v2030 = vmul.f32 %v1969, %v1755
    %v2031 = vmul.f32 %v1971, %v1755
    %v2032 = vmul.f32 %v1973, %v1755
    %v2033 = vmul.f32 %v1975, %v1755
    %v2034 = vmul.f32 %v1977, %v1755
    %v2035 = vmul.f32 %v1979, %v1755
    %v2036 = vmul.f32 %v1981, %v1755
    %v2037 = vmul.f32 %v1983, %v1755
    %v2038 = vmul.f32 %v1985, %v1755
    %v2039 = vmul.f32 %v1987, %v1755
    %v2040 = vmul.f32 %v1989, %v1755
    %v2041 = vmul.f32 %v1991, %v1755
    %v2042 = vmul.f32 %v1993, %v1755
    %v2043 = vmul.f32 %v1995, %v1755
    %v2044 = vadd.f32 %v1996, 1e-05
    %v2045 = vadd.f32 %v1997, 1e-05
    %v2046 = vadd.f32 %v1998, 1e-05
    %v2047 = vadd.f32 %v1999, 1e-05
    %v2048 = vadd.f32 %v2000, 1e-05
    %v2049 = vadd.f32 %v2001, 1e-05
    %v2050 = vadd.f32 %v2002, 1e-05
    %v2051 = vadd.f32 %v2003, 1e-05
    %v2052 = vadd.f32 %v2004, 1e-05
    %v2053 = vadd.f32 %v2005, 1e-05
    %v2054 = vadd.f32 %v2006, 1e-05
    %v2055 = vadd.f32 %v2007, 1e-05
    %v2056 = vadd.f32 %v2008, 1e-05
    %v2057 = vadd.f32 %v2009, 1e-05
    %v2058 = vadd.f32 %v2010, 1e-05
    %v2059 = vadd.f32 %v2011, 1e-05
    %v2060 = vadd.f32 %v2012, 1e-05
    %v2061 = vadd.f32 %v2013, 1e-05
    %v2062 = vadd.f32 %v2014, 1e-05
    %v2063 = vadd.f32 %v2015, 1e-05
    %v2064 = vadd.f32 %v2016, 1e-05
    %v2065 = vadd.f32 %v2017, 1e-05
    %v2066 = vadd.f32 %v2018, 1e-05
    %v2067 = vadd.f32 %v2019, 1e-05
    %v2068 = vadd.f32 %v2020, 1e-05
    %v2069 = vadd.f32 %v2021, 1e-05
    %v2070 = vadd.f32 %v2022, 1e-05
    %v2071 = vadd.f32 %v2023, 1e-05
    %v2072 = vadd.f32 %v2024, 1e-05
    %v2073 = vadd.f32 %v2025, 1e-05
    %v2074 = vadd.f32 %v2026, 1e-05
    %v2075 = vadd.f32 %v2027, 1e-05
    %v2076 = vadd.f32 %v2028, 1e-05
    %v2077 = vadd.f32 %v2029, 1e-05
    %v2078 = vadd.f32 %v2030, 1e-05
    %v2079 = vadd.f32 %v2031, 1e-05
    %v2080 = vadd.f32 %v2032, 1e-05
    %v2081 = vadd.f32 %v2033, 1e-05
    %v2082 = vadd.f32 %v2034, 1e-05
    %v2083 = vadd.f32 %v2035, 1e-05
    %v2084 = vadd.f32 %v2036, 1e-05
    %v2085 = vadd.f32 %v2037, 1e-05
    %v2086 = vadd.f32 %v2038, 1e-05
    %v2087 = vadd.f32 %v2039, 1e-05
    %v2088 = vadd.f32 %v2040, 1e-05
    %v2089 = vadd.f32 %v2041, 1e-05
    %v2090 = vadd.f32 %v2042, 1e-05
    %v2091 = vadd.f32 %v2043, 1e-05
    %v2092 = vrsqrt.pop %v2044
    %v2093 = vrsqrt.pop %v2045
    %v2094 = vrsqrt.pop %v2046
    %v2095 = vrsqrt.pop %v2047
    %v2096 = vrsqrt.pop %v2048
    %v2097 = vrsqrt.pop %v2049
    %v2098 = vrsqrt.pop %v2050
    %v2099 = vrsqrt.pop %v2051
    %v2100 = vrsqrt.pop %v2052
    %v2101 = vrsqrt.pop %v2053
    %v2102 = vrsqrt.pop %v2054
    %v2103 = vrsqrt.pop %v2055
    %v2104 = vrsqrt.pop %v2056
    %v2105 = vrsqrt.pop %v2057
    %v2106 = vrsqrt.pop %v2058
    %v2107 = vrsqrt.pop %v2059
    %v2108 = vrsqrt.pop %v2060
    %v2109 = vrsqrt.pop %v2061
    %v2110 = vrsqrt.pop %v2062
    %v2111 = vrsqrt.pop %v2063
    %v2112 = vrsqrt.pop %v2064
    %v2113 = vrsqrt.pop %v2065
    %v2114 = vrsqrt.pop %v2066
    %v2115 = vrsqrt.pop %v2067
    %v2116 = vrsqrt.pop %v2068
    %v2117 = vrsqrt.pop %v2069
    %v2118 = vrsqrt.pop %v2070
    %v2119 = vrsqrt.pop %v2071
    %v2120 = vrsqrt.pop %v2072
    %v2121 = vrsqrt.pop %v2073
    %v2122 = vrsqrt.pop %v2074
    %v2123 = vrsqrt.pop %v2075
    %v2124 = vrsqrt.pop %v2076
    %v2125 = vrsqrt.pop %v2077
    %v2126 = vrsqrt.pop %v2078
    %v2127 = vrsqrt.pop %v2079
    %v2128 = vrsqrt.pop %v2080
    %v2129 = vrsqrt.pop %v2081
    %v2130 = vrsqrt.pop %v2082
    %v2131 = vrsqrt.pop %v2083
    %v2132 = vrsqrt.pop %v2084
    %v2133 = vrsqrt.pop %v2085
    %v2134 = vrsqrt.pop %v2086
    %v2135 = vrsqrt.pop %v2087
    %v2136 = vrsqrt.pop %v2088
    %v2137 = vrsqrt.pop %v2089
    %v2138 = vrsqrt.pop %v2090
    %v2139 = vrsqrt.pop %v2091
    %v2140 = vmul.f32 %v1804, %v2092
    %v2141 = vmul.f32 %v1805, %v2093
    %v2142 = vmul.f32 %v1806, %v2094
    %v2143 = vmul.f32 %v1807, %v2095
    %v2144 = vmul.f32 %v1808, %v2096
    %v2145 = vmul.f32 %v1809, %v2097
    %v2146 = vmul.f32 %v1810, %v2098
    %v2147 = vmul.f32 %v1811, %v2099
    %v2148 = vmul.f32 %v1812, %v2100
    %v2149 = vmul.f32 %v1813, %v2101
    %v2150 = vmul.f32 %v1814, %v2102
    %v2151 = vmul.f32 %v1815, %v2103
    %v2152 = vmul.f32 %v1816, %v2104
    %v2153 = vmul.f32 %v1817, %v2105
    %v2154 = vmul.f32 %v1818, %v2106
    %v2155 = vmul.f32 %v1819, %v2107
    %v2156 = vmul.f32 %v1820, %v2108
    %v2157 = vmul.f32 %v1821, %v2109
    %v2158 = vmul.f32 %v1822, %v2110
    %v2159 = vmul.f32 %v1823, %v2111
    %v2160 = vmul.f32 %v1824, %v2112
    %v2161 = vmul.f32 %v1825, %v2113
    %v2162 = vmul.f32 %v1826, %v2114
    %v2163 = vmul.f32 %v1827, %v2115
    %v2164 = vmul.f32 %v1828, %v2116
    %v2165 = vmul.f32 %v1829, %v2117
    %v2166 = vmul.f32 %v1830, %v2118
    %v2167 = vmul.f32 %v1831, %v2119
    %v2168 = vmul.f32 %v1832, %v2120
    %v2169 = vmul.f32 %v1833, %v2121
    %v2170 = vmul.f32 %v1834, %v2122
    %v2171 = vmul.f32 %v1835, %v2123
    %v2172 = vmul.f32 %v1836, %v2124
    %v2173 = vmul.f32 %v1837, %v2125
    %v2174 = vmul.f32 %v1838, %v2126
    %v2175 = vmul.f32 %v1839, %v2127
    %v2176 = vmul.f32 %v1840, %v2128
    %v2177 = vmul.f32 %v1841, %v2129
    %v2178 = vmul.f32 %v1842, %v2130
    %v2179 = vmul.f32 %v1843, %v2131
    %v2180 = vmul.f32 %v1844, %v2132
    %v2181 = vmul.f32 %v1845, %v2133
    %v2182 = vmul.f32 %v1846, %v2134
    %v2183 = vmul.f32 %v1847, %v2135
    %v2184 = vmul.f32 %v1848, %v2136
    %v2185 = vmul.f32 %v1849, %v2137
    %v2186 = vmul.f32 %v1850, %v2138
    %v2187 = vmul.f32 %v1851, %v2139
    %v2188 = vld [vmem:[%s3] sm:$0x1]
    %v2190 = vlaneseq
    %v2191 = vshrl.u32 %v2190, 7
    %v2192 = vsub.s32 0, %v2191
    %v2193 = vrot.slane %v2188, %v2192
    %v2195 = vmul.f32 %v2140, %v2193
    %v2196 = vmul.f32 %v2141, %v2193
    %v2197 = vmul.f32 %v2142, %v2193
    %v2198 = vmul.f32 %v2143, %v2193
    %v2199 = vmul.f32 %v2144, %v2193
    %v2200 = vmul.f32 %v2145, %v2193
    %v2201 = vmul.f32 %v2146, %v2193
    %v2202 = vmul.f32 %v2147, %v2193
    %v2203 = vmul.f32 %v2148, %v2193
    %v2204 = vmul.f32 %v2149, %v2193
    %v2205 = vmul.f32 %v2150, %v2193
    %v2206 = vmul.f32 %v2151, %v2193
    %v2207 = vmul.f32 %v2152, %v2193
    %v2208 = vmul.f32 %v2153, %v2193
    %v2209 = vmul.f32 %v2154, %v2193
    %v2210 = vmul.f32 %v2155, %v2193
    %v2211 = vmul.f32 %v2156, %v2193
    %v2212 = vmul.f32 %v2157, %v2193
    %v2213 = vmul.f32 %v2158, %v2193
    %v2214 = vmul.f32 %v2159, %v2193
    %v2215 = vmul.f32 %v2160, %v2193
    %v2216 = vmul.f32 %v2161, %v2193
    %v2217 = vmul.f32 %v2162, %v2193
    %v2218 = vmul.f32 %v2163, %v2193
    %v2219 = vmul.f32 %v2164, %v2193
    %v2220 = vmul.f32 %v2165, %v2193
    %v2221 = vmul.f32 %v2166, %v2193
    %v2222 = vmul.f32 %v2167, %v2193
    %v2223 = vmul.f32 %v2168, %v2193
    %v2224 = vmul.f32 %v2169, %v2193
    %v2225 = vmul.f32 %v2170, %v2193
    %v2226 = vmul.f32 %v2171, %v2193
    %v2227 = vmul.f32 %v2172, %v2193
    %v2228 = vmul.f32 %v2173, %v2193
    %v2229 = vmul.f32 %v2174, %v2193
    %v2230 = vmul.f32 %v2175, %v2193
    %v2231 = vmul.f32 %v2176, %v2193
    %v2232 = vmul.f32 %v2177, %v2193
    %v2233 = vmul.f32 %v2178, %v2193
    %v2234 = vmul.f32 %v2179, %v2193
    %v2235 = vmul.f32 %v2180, %v2193
    %v2236 = vmul.f32 %v2181, %v2193
    %v2237 = vmul.f32 %v2182, %v2193
    %v2238 = vmul.f32 %v2183, %v2193
    %v2239 = vmul.f32 %v2184, %v2193
    %v2240 = vmul.f32 %v2185, %v2193
    %v2241 = vmul.f32 %v2186, %v2193
    %v2242 = vmul.f32 %v2187, %v2193
    %v2243 = vld [vmem:[%s4] sm:$0x1]
    %v2245 = vlaneseq
    %v2246 = vshrl.u32 %v2245, 7
    %v2247 = vsub.s32 0, %v2246
    %v2248 = vrot.slane %v2243, %v2247
    %v2250 = vadd.f32 %v2195, %v2248
    %v2251 = vadd.f32 %v2196, %v2248
    %v2252 = vadd.f32 %v2197, %v2248
    %v2253 = vadd.f32 %v2198, %v2248
    %v2254 = vadd.f32 %v2199, %v2248
    %v2255 = vadd.f32 %v2200, %v2248
    %v2256 = vadd.f32 %v2201, %v2248
    %v2257 = vadd.f32 %v2202, %v2248
    %v2258 = vadd.f32 %v2203, %v2248
    %v2259 = vadd.f32 %v2204, %v2248
    %v2260 = vadd.f32 %v2205, %v2248
    %v2261 = vadd.f32 %v2206, %v2248
    %v2262 = vadd.f32 %v2207, %v2248
    %v2263 = vadd.f32 %v2208, %v2248
    %v2264 = vadd.f32 %v2209, %v2248
    %v2265 = vadd.f32 %v2210, %v2248
    %v2266 = vadd.f32 %v2211, %v2248
    %v2267 = vadd.f32 %v2212, %v2248
    %v2268 = vadd.f32 %v2213, %v2248
    %v2269 = vadd.f32 %v2214, %v2248
    %v2270 = vadd.f32 %v2215, %v2248
    %v2271 = vadd.f32 %v2216, %v2248
    %v2272 = vadd.f32 %v2217, %v2248
    %v2273 = vadd.f32 %v2218, %v2248
    %v2274 = vadd.f32 %v2219, %v2248
    %v2275 = vadd.f32 %v2220, %v2248
    %v2276 = vadd.f32 %v2221, %v2248
    %v2277 = vadd.f32 %v2222, %v2248
    %v2278 = vadd.f32 %v2223, %v2248
    %v2279 = vadd.f32 %v2224, %v2248
    %v2280 = vadd.f32 %v2225, %v2248
    %v2281 = vadd.f32 %v2226, %v2248
    %v2282 = vadd.f32 %v2227, %v2248
    %v2283 = vadd.f32 %v2228, %v2248
    %v2284 = vadd.f32 %v2229, %v2248
    %v2285 = vadd.f32 %v2230, %v2248
    %v2286 = vadd.f32 %v2231, %v2248
    %v2287 = vadd.f32 %v2232, %v2248
    %v2288 = vadd.f32 %v2233, %v2248
    %v2289 = vadd.f32 %v2234, %v2248
    %v2290 = vadd.f32 %v2235, %v2248
    %v2291 = vadd.f32 %v2236, %v2248
    %v2292 = vadd.f32 %v2237, %v2248
    %v2293 = vadd.f32 %v2238, %v2248
    %v2294 = vadd.f32 %v2239, %v2248
    %v2295 = vadd.f32 %v2240, %v2248
    %v2296 = vadd.f32 %v2241, %v2248
    %v2297 = vadd.f32 %v2242, %v2248
    %v2298 = vld [vmem:[#allocation7] sm:$0xff]
    %v2299 = vld [vmem:[#allocation7 + $0x8] sm:$0xff]
    %v2300 = vld [vmem:[#allocation7 + $0x10] sm:$0xff]
    %v2301 = vld [vmem:[#allocation7 + $0x18] sm:$0xff]
    %v2302 = vld [vmem:[#allocation7 + $0x20] sm:$0xff]
    %v2303 = vld [vmem:[#allocation7 + $0x28] sm:$0xff]
    %v2304 = vld [vmem:[#allocation7 + $0x30] sm:$0xff]
    %v2305 = vld [vmem:[#allocation7 + $0x38] sm:$0xff]
    %v2306 = vld [vmem:[#allocation7 + $0x40] sm:$0xff]
    %v2307 = vld [vmem:[#allocation7 + $0x48] sm:$0xff]
    %v2308 = vld [vmem:[#allocation7 + $0x50] sm:$0xff]
    %v2309 = vld [vmem:[#allocation7 + $0x58] sm:$0xff]
    %v2310 = vld [vmem:[#allocation7 + $0x60] sm:$0xff]
    %v2311 = vld [vmem:[#allocation7 + $0x68] sm:$0xff]
    %v2312 = vld [vmem:[#allocation7 + $0x70] sm:$0xff]
    %v2313 = vld [vmem:[#allocation7 + $0x78] sm:$0xff]
    %v2314 = vld [vmem:[#allocation7 + $0x80] sm:$0xff]
    %v2315 = vld [vmem:[#allocation7 + $0x88] sm:$0xff]
    %v2316 = vld [vmem:[#allocation7 + $0x90] sm:$0xff]
    %v2317 = vld [vmem:[#allocation7 + $0x98] sm:$0xff]
    %v2318 = vld [vmem:[#allocation7 + $0xa0] sm:$0xff]
    %v2319 = vld [vmem:[#allocation7 + $0xa8] sm:$0xff]
    %v2320 = vld [vmem:[#allocation7 + $0xb0] sm:$0xff]
    %v2321 = vld [vmem:[#allocation7 + $0xb8] sm:$0xff]
    %v2322 = vld [vmem:[#allocation7 + $0xc0] sm:$0xff]
    %v2323 = vld [vmem:[#allocation7 + $0xc8] sm:$0xff]
    %v2324 = vld [vmem:[#allocation7 + $0xd0] sm:$0xff]
    %v2325 = vld [vmem:[#allocation7 + $0xd8] sm:$0xff]
    %v2326 = vld [vmem:[#allocation7 + $0xe0] sm:$0xff]
    %v2327 = vld [vmem:[#allocation7 + $0xe8] sm:$0xff]
    %v2328 = vld [vmem:[#allocation7 + $0xf0] sm:$0xff]
    %v2329 = vld [vmem:[#allocation7 + $0xf8] sm:$0xff]
    %v2330 = vld [vmem:[#allocation7 + $0x100] sm:$0xff]
    %v2331 = vld [vmem:[#allocation7 + $0x108] sm:$0xff]
    %v2332 = vld [vmem:[#allocation7 + $0x110] sm:$0xff]
    %v2333 = vld [vmem:[#allocation7 + $0x118] sm:$0xff]
    %v2334 = vld [vmem:[#allocation7 + $0x120] sm:$0xff]
    %v2335 = vld [vmem:[#allocation7 + $0x128] sm:$0xff]
    %v2336 = vld [vmem:[#allocation7 + $0x130] sm:$0xff]
    %v2337 = vld [vmem:[#allocation7 + $0x138] sm:$0xff]
    %v2338 = vld [vmem:[#allocation7 + $0x140] sm:$0xff]
    %v2339 = vld [vmem:[#allocation7 + $0x148] sm:$0xff]
    %v2340 = vld [vmem:[#allocation7 + $0x150] sm:$0xff]
    %v2341 = vld [vmem:[#allocation7 + $0x158] sm:$0xff]
    %v2342 = vld [vmem:[#allocation7 + $0x160] sm:$0xff]
    %v2343 = vld [vmem:[#allocation7 + $0x168] sm:$0xff]
    %v2344 = vld [vmem:[#allocation7 + $0x170] sm:$0xff]
    %v2345 = vld [vmem:[#allocation7 + $0x178] sm:$0xff]
    %v2346 = vadd.f32 %v2250, %v2298
    %v2347 = vadd.f32 %v2251, %v2299
    %v2348 = vadd.f32 %v2252, %v2300
    %v2349 = vadd.f32 %v2253, %v2301
    %v2350 = vadd.f32 %v2254, %v2302
    %v2351 = vadd.f32 %v2255, %v2303
    %v2352 = vadd.f32 %v2256, %v2304
    %v2353 = vadd.f32 %v2257, %v2305
    %v2354 = vadd.f32 %v2258, %v2306
    %v2355 = vadd.f32 %v2259, %v2307
    %v2356 = vadd.f32 %v2260, %v2308
    %v2357 = vadd.f32 %v2261, %v2309
    %v2358 = vadd.f32 %v2262, %v2310
    %v2359 = vadd.f32 %v2263, %v2311
    %v2360 = vadd.f32 %v2264, %v2312
    %v2361 = vadd.f32 %v2265, %v2313
    %v2362 = vadd.f32 %v2266, %v2314
    %v2363 = vadd.f32 %v2267, %v2315
    %v2364 = vadd.f32 %v2268, %v2316
    %v2365 = vadd.f32 %v2269, %v2317
    %v2366 = vadd.f32 %v2270, %v2318
    %v2367 = vadd.f32 %v2271, %v2319
    %v2368 = vadd.f32 %v2272, %v2320
    %v2369 = vadd.f32 %v2273, %v2321
    %v2370 = vadd.f32 %v2274, %v2322
    %v2371 = vadd.f32 %v2275, %v2323
    %v2372 = vadd.f32 %v2276, %v2324
    %v2373 = vadd.f32 %v2277, %v2325
    %v2374 = vadd.f32 %v2278, %v2326
    %v2375 = vadd.f32 %v2279, %v2327
    %v2376 = vadd.f32 %v2280, %v2328
    %v2377 = vadd.f32 %v2281, %v2329
    %v2378 = vadd.f32 %v2282, %v2330
    %v2379 = vadd.f32 %v2283, %v2331
    %v2380 = vadd.f32 %v2284, %v2332
    %v2381 = vadd.f32 %v2285, %v2333
    %v2382 = vadd.f32 %v2286, %v2334
    %v2383 = vadd.f32 %v2287, %v2335
    %v2384 = vadd.f32 %v2288, %v2336
    %v2385 = vadd.f32 %v2289, %v2337
    %v2386 = vadd.f32 %v2290, %v2338
    %v2387 = vadd.f32 %v2291, %v2339
    %v2388 = vadd.f32 %v2292, %v2340
    %v2389 = vadd.f32 %v2293, %v2341
    %v2390 = vadd.f32 %v2294, %v2342
    %v2391 = vadd.f32 %v2295, %v2343
    %v2392 = vadd.f32 %v2296, %v2344
    %v2393 = vadd.f32 %v2297, %v2345
    %2394 = vst [vmem:[#allocation8] sm:$0xff] %v2346
    %2395 = vst [vmem:[#allocation8 + $0x8] sm:$0xff] %v2347
    %2396 = vst [vmem:[#allocation8 + $0x10] sm:$0xff] %v2348
    %2397 = vst [vmem:[#allocation8 + $0x18] sm:$0xff] %v2349
    %2398 = vst [vmem:[#allocation8 + $0x20] sm:$0xff] %v2350
    %2399 = vst [vmem:[#allocation8 + $0x28] sm:$0xff] %v2351
    %2400 = vst [vmem:[#allocation8 + $0x30] sm:$0xff] %v2352
    %2401 = vst [vmem:[#allocation8 + $0x38] sm:$0xff] %v2353
    %2402 = vst [vmem:[#allocation8 + $0x40] sm:$0xff] %v2354
    %2403 = vst [vmem:[#allocation8 + $0x48] sm:$0xff] %v2355
    %2404 = vst [vmem:[#allocation8 + $0x50] sm:$0xff] %v2356
    %2405 = vst [vmem:[#allocation8 + $0x58] sm:$0xff] %v2357
    %2406 = vst [vmem:[#allocation8 + $0x60] sm:$0xff] %v2358
    %2407 = vst [vmem:[#allocation8 + $0x68] sm:$0xff] %v2359
    %2408 = vst [vmem:[#allocation8 + $0x70] sm:$0xff] %v2360
    %2409 = vst [vmem:[#allocation8 + $0x78] sm:$0xff] %v2361
    %2410 = vst [vmem:[#allocation8 + $0x80] sm:$0xff] %v2362
    %2411 = vst [vmem:[#allocation8 + $0x88] sm:$0xff] %v2363
    %2412 = vst [vmem:[#allocation8 + $0x90] sm:$0xff] %v2364
    %2413 = vst [vmem:[#allocation8 + $0x98] sm:$0xff] %v2365
    %2414 = vst [vmem:[#allocation8 + $0xa0] sm:$0xff] %v2366
    %2415 = vst [vmem:[#allocation8 + $0xa8] sm:$0xff] %v2367
    %2416 = vst [vmem:[#allocation8 + $0xb0] sm:$0xff] %v2368
    %2417 = vst [vmem:[#allocation8 + $0xb8] sm:$0xff] %v2369
    %2418 = vst [vmem:[#allocation8 + $0xc0] sm:$0xff] %v2370
    %2419 = vst [vmem:[#allocation8 + $0xc8] sm:$0xff] %v2371
    %2420 = vst [vmem:[#allocation8 + $0xd0] sm:$0xff] %v2372
    %2421 = vst [vmem:[#allocation8 + $0xd8] sm:$0xff] %v2373
    %2422 = vst [vmem:[#allocation8 + $0xe0] sm:$0xff] %v2374
    %2423 = vst [vmem:[#allocation8 + $0xe8] sm:$0xff] %v2375
    %2424 = vst [vmem:[#allocation8 + $0xf0] sm:$0xff] %v2376
    %2425 = vst [vmem:[#allocation8 + $0xf8] sm:$0xff] %v2377
    %2426 = vst [vmem:[#allocation8 + $0x100] sm:$0xff] %v2378
    %2427 = vst [vmem:[#allocation8 + $0x108] sm:$0xff] %v2379
    %2428 = vst [vmem:[#allocation8 + $0x110] sm:$0xff] %v2380
    %2429 = vst [vmem:[#allocation8 + $0x118] sm:$0xff] %v2381
    %2430 = vst [vmem:[#allocation8 + $0x120] sm:$0xff] %v2382
    %2431 = vst [vmem:[#allocation8 + $0x128] sm:$0xff] %v2383
    %2432 = vst [vmem:[#allocation8 + $0x130] sm:$0xff] %v2384
    %2433 = vst [vmem:[#allocation8 + $0x138] sm:$0xff] %v2385
    %2434 = vst [vmem:[#allocation8 + $0x140] sm:$0xff] %v2386
    %2435 = vst [vmem:[#allocation8 + $0x148] sm:$0xff] %v2387
    %2436 = vst [vmem:[#allocation8 + $0x150] sm:$0xff] %v2388
    %2437 = vst [vmem:[#allocation8 + $0x158] sm:$0xff] %v2389
    %2438 = vst [vmem:[#allocation8 + $0x160] sm:$0xff] %v2390
    %2439 = vst [vmem:[#allocation8 + $0x168] sm:$0xff] %v2391
    %2440 = vst [vmem:[#allocation8 + $0x170] sm:$0xff] %v2392
    %2441 = vst [vmem:[#allocation8 + $0x178] sm:$0xff] %v2393
    // Predicated region
    $region34: #{tpu_custom_call.1} parent=1 // pred_check
      _
    $region35: #{tpu_custom_call.1} parent=1 // pred_check_branch
      %2443 = sbr.rel (0) target = $region37
    $region36: #{tpu_custom_call.1} parent=1 // pred_region
      %s2445 = ssub.s32 6144, 6144
      %2446 = vsyncadd [#allocation4], %s2445
      %s2447 = sshll.u32 [#allocation8], 4
      %s2448 = int_to_ptr.vmem [resolvable:$true] %s2447
      %2453 = dma.vmem_to_hbm [thread:$0]  %s2448, 6144, %s5, [#allocation4], 128, 128, 8
    $region37: #{tpu_custom_call.1} parent=1 // pred_fallthru
      _
    // Predicated region
    $region38: #{tpu_custom_call.1} parent=1 // pred_check
      _
    $region39: #{tpu_custom_call.1} parent=1 // pred_check_branch
      %2455 = sbr.rel (0) target = $region41
    $region40: #{tpu_custom_call.1} parent=1 // pred_region
      %2456 = dma.done [#allocation4], 6144
    $region41: #{tpu_custom_call.1} parent=1 // pred_fallthru
      _
    %2457 = vsyncpa [#allocation3], 1
    %2458 = vsyncpa [#allocation6], 1
    %2459 = vsyncpa [#allocation4], 1

</llo_original>
